<compile_context>
chip_gen: v7x
topology: tpu7x:2x2x1
jax: 0.10.0
libtpu: 0.0.40
codegen_flags: <defaults>
</compile_context>

<pallas_src>
import jax
import jax.numpy as jnp
import numpy as np
from jax import lax
from jax.experimental import pallas as pl
from jax.experimental.pallas import tpu as pltpu


def _round_up(x, m):
    return ((x + m - 1) // m) * m


def _discriminator_kernel(emb_ref, wih_ref, whh_ref, b_ref, wa_ref, ba_ref,
                          out_ref, buf_scr, h_scr):
    """Fused tanh-RNN base model + Linear(hidden, 1) adaptor + squeeze(-1).

    emb_ref : (seq, bb, emb_dim)   f32       embedded inputs (one batch block)
    wih_ref : (emb_dim, hidden)    f32/bf16
    whh_ref : (hidden, hidden)     f32/bf16
    b_ref   : (1, hidden)          f32
    wa_ref  : (1, hidden)          f32       adaptor weight, hidden on lanes
    ba_ref  : (1, 1)               f32       adaptor bias
    out_ref : (1, seq, bb)         f32       logits for this batch block
    buf_scr : (seq, bb, hidden)    f32       x-projection, then RNN outputs
    h_scr   : (bb, hidden)         f32       recurrent hidden state
    """
    seq, bb, emb_dim = emb_ref.shape
    hidden = whh_ref.shape[1]
    mm_dtype = whh_ref.dtype

    # ---- Phase 1: input projection for ALL timesteps as one big GEMM ------
    # (no sequential dependency; bias broadcast hoisted out of the loop).
    x2d = emb_ref[...].reshape(seq * bb, emb_dim).astype(mm_dtype)
    xproj = jnp.dot(x2d, wih_ref[...], preferred_element_type=jnp.float32)
    buf_scr[...] = xproj.reshape(seq, bb, hidden) + b_ref[...]

    # ---- Phase 2: serial recurrence; only h @ W_hh + tanh per step --------
    h_scr[...] = jnp.zeros_like(h_scr)

    def step(t, carry):
        pre = buf_scr[t] + jnp.dot(h_scr[...].astype(mm_dtype), whh_ref[...],
                                   preferred_element_type=jnp.float32)
        h = jnp.tanh(pre)
        h_scr[...] = h
        buf_scr[t] = h            # reuse the x-proj slot for the RNN output
        return carry

    lax.fori_loop(0, seq, step, 0, unroll=min(seq, 8))

    # ---- Phase 3: adaptor Linear(hidden, 1) + squeeze(-1), one slab store --
    logits = jnp.sum(buf_scr[...] * wa_ref[...], axis=-1) + ba_ref[...]  # (seq, bb)
    out_ref[0] = logits


def discriminator_forward(emb, w_ih, w_hh, b_h, w_adapt, b_adapt,
                          *, batch_block=None, matmul_dtype=jnp.float32):
    """Fused base_model(tanh-RNN) + adaptor forward. Returns (seq, batch) logits."""
    seq, batch, emb_dim = emb.shape
    hidden = w_hh.shape[0]

    # Pad to hardware-native tile sizes (sublane 8, lane 128).  Padding is
    # exact zeros, so padded hidden/emb columns stay identically zero through
    # the recurrence and padded batch/time entries are sliced off below.
    seq_p = _round_up(seq, 8)
    bat_p = _round_up(batch, 8)
    emb_p = _round_up(emb_dim, 128)
    hid_p = _round_up(hidden, 128)

    f32 = jnp.float32
    emb_pad = jnp.zeros((seq_p, bat_p, emb_p), f32)
    emb_pad = emb_pad.at[:seq, :batch, :emb_dim].set(emb.astype(f32))
    wih_pad = jnp.zeros((emb_p, hid_p), f32).at[:emb_dim, :hidden].set(w_ih.astype(f32))
    whh_pad = jnp.zeros((hid_p, hid_p), f32).at[:hidden, :hidden].set(w_hh.astype(f32))
    b_pad = jnp.zeros((1, hid_p), f32).at[:, :hidden].set(b_h.reshape(1, hidden).astype(f32))
    wa_pad = jnp.zeros((1, hid_p), f32).at[:, :hidden].set(
        w_adapt.reshape(1, hidden).astype(f32))
    ba = b_adapt.reshape(1, 1).astype(f32)

    # Optional bf16 matmul operands (f32 accumulation) for v6e/v7x MXU throughput.
    wih_pad = wih_pad.astype(matmul_dtype)
    whh_pad = whh_pad.astype(matmul_dtype)

    # Optional megacore batch split: the recurrence is serial in time but
    # embarrassingly parallel in batch, so batch blocks map to a "parallel"
    # grid axis (e.g. batch_block = bat_p // 2 on v7x).  Default: one block.
    if batch_block is None:
        batch_block = bat_p
    assert bat_p % batch_block == 0 and batch_block % 8 == 0
    nb = bat_p // batch_block

    out = pl.pallas_call(
        _discriminator_kernel,
        out_shape=jax.ShapeDtypeStruct((nb, seq_p, batch_block), f32),
        grid=(nb,),
        in_specs=[
            pl.BlockSpec((seq_p, batch_block, emb_p), lambda i: (0, i, 0)),
            pl.BlockSpec((emb_p, hid_p), lambda i: (0, 0)),
            pl.BlockSpec((hid_p, hid_p), lambda i: (0, 0)),
            pl.BlockSpec((1, hid_p), lambda i: (0, 0)),
            pl.BlockSpec((1, hid_p), lambda i: (0, 0)),
            pl.BlockSpec((1, 1), lambda i: (0, 0)),
        ],
        out_specs=pl.BlockSpec((1, seq_p, batch_block), lambda i: (i, 0, 0)),
        scratch_shapes=[
            pltpu.VMEM((seq_p, batch_block, hid_p), f32),   # x_proj / RNN outputs
            pltpu.VMEM((batch_block, hid_p), f32),          # hidden state
        ],
        compiler_params=pltpu.CompilerParams(
            dimension_semantics=("parallel",),
            vmem_limit_bytes=64 * 1024 * 1024,              # fits v7x's 64 MiB
        ),
    )(emb_pad, wih_pad, whh_pad, b_pad, wa_pad, ba)

    # (nb, seq_p, bb) -> (seq_p, bat_p), then strip padding.
    logits = jnp.transpose(out, (1, 0, 2)).reshape(seq_p, bat_p)
    return logits[:seq, :batch]


def discriminator_reference(emb, w_ih, w_hh, b_h, w_adapt, b_adapt):
    """Pure-JAX reference of the same forward pass (for correctness check)."""
    _, batch, _ = emb.shape
    hidden = w_hh.shape[0]

    def step(h, x_t):
        h_new = jnp.tanh(x_t @ w_ih + h @ w_hh + b_h)
        return h_new, h_new

    h0 = jnp.zeros((batch, hidden), jnp.float32)
    _, outputs = lax.scan(step, h0, emb)                    # (seq, batch, hidden)
    logits = outputs @ w_adapt + b_adapt                    # (seq, batch, 1)
    return jnp.squeeze(logits, -1)                          # (seq, batch)


if __name__ == "__main__":
    # Small, deterministic synthetic setup consistent with the module's forward.
    seq, batch = 8, 2
    vocab, emb_dim, hidden = 16, 32, 32

    key = jax.random.PRNGKey(0)
    k_emb, k_tok, k_ih, k_hh, k_b, k_wa, k_ba = jax.random.split(key, 7)

    # base_model parameters (embedding + tanh RNN), adaptor (Linear(hidden, 1)).
    emb_table = jax.random.normal(k_emb, (vocab, emb_dim), jnp.float32) * 0.1
    tokens = jax.random.randint(k_tok, (seq, batch), 0, vocab)
    w_ih = jax.random.normal(k_ih, (emb_dim, hidden), jnp.float32) * 0.1
    w_hh = jax.random.normal(k_hh, (hidden, hidden), jnp.float32) * 0.1
    b_h = jax.random.normal(k_b, (1, hidden), jnp.float32) * 0.1
    w_adapt = jax.random.normal(k_wa, (hidden, 1), jnp.float32) * 0.1
    b_adapt = jax.random.normal(k_ba, (1, 1), jnp.float32) * 0.1

    # Glue: embedding lookup (base_model's input embedding), time-major layout.
    emb = emb_table[tokens]                                 # (seq, batch, emb_dim)

    logits = discriminator_forward(emb, w_ih, w_hh, b_h, w_adapt, b_adapt)
    logits = jax.block_until_ready(logits)

    ref = discriminator_reference(emb, w_ih, w_hh, b_h, w_adapt, b_adapt)
    np.testing.assert_allclose(np.asarray(logits), np.asarray(ref),
                               rtol=1e-5, atol=1e-5)
    assert logits.shape == (seq, batch)

    print("KERNEL_OK")
</pallas_src>

<mosaic_0001>
module attributes {stable_mosaic.version = 11 : i64} {
  func.func @_discriminator_kernel(%arg0: i32, %arg1: memref<8x8x128xf32, #tpu.memory_space<vmem>>, %arg2: memref<128x128xf32, #tpu.memory_space<vmem>>, %arg3: memref<128x128xf32, #tpu.memory_space<vmem>>, %arg4: memref<1x128xf32, #tpu.memory_space<vmem>>, %arg5: memref<1x128xf32, #tpu.memory_space<vmem>>, %arg6: memref<1x1xf32, #tpu.memory_space<vmem>>, %arg7: memref<1x8x8xf32, #tpu.memory_space<vmem>>, %arg8: memref<8x8x128xf32, #tpu.memory_space<vmem>>, %arg9: memref<8x128xf32, #tpu.memory_space<vmem>>) attributes {dimension_semantics = [#tpu.dimension_semantics<parallel>], iteration_bounds = array<i64: 1>, scalar_prefetch = 0 : i64, scratch_operands = 2 : i64, tpu.core_type = #tpu.core_type<tc>, window_params = [{transform_indices = @transform_0, window_bounds = array<i64: 8, 8, 128>}, {pipeline_mode = #tpu.pipeline_mode<synchronous>, transform_indices = @transform_1, window_bounds = array<i64: 128, 128>}, {pipeline_mode = #tpu.pipeline_mode<synchronous>, transform_indices = @transform_2, window_bounds = array<i64: 128, 128>}, {pipeline_mode = #tpu.pipeline_mode<synchronous>, transform_indices = @transform_3, window_bounds = array<i64: 1, 128>}, {pipeline_mode = #tpu.pipeline_mode<synchronous>, transform_indices = @transform_4, window_bounds = array<i64: 1, 128>}, {pipeline_mode = #tpu.pipeline_mode<synchronous>, transform_indices = @transform_5, window_bounds = array<i64: 1, 1>}, {transform_indices = @transform_6, window_bounds = array<i64: 1, 8, 8>}]} {
    %c0 = arith.constant 0 : index
    %c0_0 = arith.constant 0 : index
    %c0_1 = arith.constant 0 : index
    %0 = vector.load %arg1[%c0, %c0_0, %c0_1] : memref<8x8x128xf32, #tpu.memory_space<vmem>>, vector<8x8x128xf32>
    %1 = vector.shape_cast %0 : vector<8x8x128xf32> to vector<64x128xf32>
    %c0_2 = arith.constant 0 : index
    %c0_3 = arith.constant 0 : index
    %2 = vector.load %arg2[%c0_2, %c0_3] : memref<128x128xf32, #tpu.memory_space<vmem>>, vector<128x128xf32>
    %cst = arith.constant dense<0.000000e+00> : vector<64x128xf32>
    %3 = tpu.matmul %1, %2, %cst {dimension_numbers = #tpu.dot_dimension_numbers<[1], [0], [0], [1], [0, 0, 1, 1], [], []>} : vector<64x128xf32>, vector<128x128xf32>, vector<64x128xf32> -> vector<64x128xf32>
    %4 = vector.shape_cast %3 : vector<64x128xf32> to vector<8x8x128xf32>
    %c0_4 = arith.constant 0 : index
    %c0_5 = arith.constant 0 : index
    %5 = vector.load %arg4[%c0_4, %c0_5] : memref<1x128xf32, #tpu.memory_space<vmem>>, vector<1x128xf32>
    %6 = vector.shape_cast %5 : vector<1x128xf32> to vector<1x1x128xf32>
    %7 = vector.broadcast %6 : vector<1x1x128xf32> to vector<8x8x128xf32>
    %8 = arith.addf %4, %7 : vector<8x8x128xf32>
    %c0_6 = arith.constant 0 : index
    %c0_7 = arith.constant 0 : index
    %c0_8 = arith.constant 0 : index
    %9 = vector.load %arg8[%c0_6, %c0_7, %c0_8] : memref<8x8x128xf32, #tpu.memory_space<vmem>>, vector<8x8x128xf32>
    tpu.vector_store %arg8[%c0_6, %c0_7, %c0_8], %8 {strides = array<i32>} : memref<8x8x128xf32, #tpu.memory_space<vmem>>, vector<8x8x128xf32>,
    %cst_9 = arith.constant 0.000000e+00 : f32
    %10 = vector.broadcast %cst_9 : f32 to vector<8x128xf32>
    %c0_10 = arith.constant 0 : index
    %c0_11 = arith.constant 0 : index
    %11 = vector.load %arg9[%c0_10, %c0_11] : memref<8x128xf32, #tpu.memory_space<vmem>>, vector<8x128xf32>
    tpu.vector_store %arg9[%c0_10, %c0_11], %10 {strides = array<i32>} : memref<8x128xf32, #tpu.memory_space<vmem>>, vector<8x128xf32>,
    %c0_i32 = arith.constant 0 : i32
    %12 = arith.index_cast %c0_i32 : i32 to index
    %c0_12 = arith.constant 0 : index
    %c0_13 = arith.constant 0 : index
    %13 = vector.load %arg8[%12, %c0_12, %c0_13] : memref<8x8x128xf32, #tpu.memory_space<vmem>>, vector<1x8x128xf32>
    %14 = vector.shape_cast %13 : vector<1x8x128xf32> to vector<8x128xf32>
    %c0_14 = arith.constant 0 : index
    %c0_15 = arith.constant 0 : index
    %15 = vector.load %arg9[%c0_14, %c0_15] : memref<8x128xf32, #tpu.memory_space<vmem>>, vector<8x128xf32>
    %c0_16 = arith.constant 0 : index
    %c0_17 = arith.constant 0 : index
    %16 = vector.load %arg3[%c0_16, %c0_17] : memref<128x128xf32, #tpu.memory_space<vmem>>, vector<128x128xf32>
    %cst_18 = arith.constant dense<0.000000e+00> : vector<8x128xf32>
    %17 = tpu.matmul %15, %16, %cst_18 {dimension_numbers = #tpu.dot_dimension_numbers<[1], [0], [0], [1], [0, 0, 1, 1], [], []>} : vector<8x128xf32>, vector<128x128xf32>, vector<8x128xf32> -> vector<8x128xf32>
    %18 = arith.addf %14, %17 : vector<8x128xf32>
    %19 = math.tanh %18 : vector<8x128xf32>
    %c0_19 = arith.constant 0 : index
    %c0_20 = arith.constant 0 : index
    %20 = vector.load %arg9[%c0_19, %c0_20] : memref<8x128xf32, #tpu.memory_space<vmem>>, vector<8x128xf32>
    tpu.vector_store %arg9[%c0_19, %c0_20], %19 {strides = array<i32>} : memref<8x128xf32, #tpu.memory_space<vmem>>, vector<8x128xf32>,
    %21 = arith.index_cast %c0_i32 : i32 to index
    %c0_21 = arith.constant 0 : index
    %c0_22 = arith.constant 0 : index
    %22 = vector.load %arg8[%21, %c0_21, %c0_22] : memref<8x8x128xf32, #tpu.memory_space<vmem>>, vector<1x8x128xf32>
    %23 = vector.shape_cast %22 : vector<1x8x128xf32> to vector<8x128xf32>
    %24 = vector.shape_cast %19 : vector<8x128xf32> to vector<1x8x128xf32>
    tpu.vector_store %arg8[%21, %c0_21, %c0_22], %24 {strides = array<i32>} : memref<8x8x128xf32, #tpu.memory_space<vmem>>, vector<1x8x128xf32>,
    %c1_i32 = arith.constant 1 : i32
    %25 = arith.index_cast %c1_i32 : i32 to index
    %c0_23 = arith.constant 0 : index
    %c0_24 = arith.constant 0 : index
    %26 = vector.load %arg8[%25, %c0_23, %c0_24] : memref<8x8x128xf32, #tpu.memory_space<vmem>>, vector<1x8x128xf32>
    %27 = vector.shape_cast %26 : vector<1x8x128xf32> to vector<8x128xf32>
    %c0_25 = arith.constant 0 : index
    %c0_26 = arith.constant 0 : index
    %28 = vector.load %arg9[%c0_25, %c0_26] : memref<8x128xf32, #tpu.memory_space<vmem>>, vector<8x128xf32>
    %c0_27 = arith.constant 0 : index
    %c0_28 = arith.constant 0 : index
    %29 = vector.load %arg3[%c0_27, %c0_28] : memref<128x128xf32, #tpu.memory_space<vmem>>, vector<128x128xf32>
    %cst_29 = arith.constant dense<0.000000e+00> : vector<8x128xf32>
    %30 = tpu.matmul %28, %29, %cst_29 {dimension_numbers = #tpu.dot_dimension_numbers<[1], [0], [0], [1], [0, 0, 1, 1], [], []>} : vector<8x128xf32>, vector<128x128xf32>, vector<8x128xf32> -> vector<8x128xf32>
    %31 = arith.addf %27, %30 : vector<8x128xf32>
    %32 = math.tanh %31 : vector<8x128xf32>
    %c0_30 = arith.constant 0 : index
    %c0_31 = arith.constant 0 : index
    %33 = vector.load %arg9[%c0_30, %c0_31] : memref<8x128xf32, #tpu.memory_space<vmem>>, vector<8x128xf32>
    tpu.vector_store %arg9[%c0_30, %c0_31], %32 {strides = array<i32>} : memref<8x128xf32, #tpu.memory_space<vmem>>, vector<8x128xf32>,
    %34 = arith.index_cast %c1_i32 : i32 to index
    %c0_32 = arith.constant 0 : index
    %c0_33 = arith.constant 0 : index
    %35 = vector.load %arg8[%34, %c0_32, %c0_33] : memref<8x8x128xf32, #tpu.memory_space<vmem>>, vector<1x8x128xf32>
    %36 = vector.shape_cast %35 : vector<1x8x128xf32> to vector<8x128xf32>
    %37 = vector.shape_cast %32 : vector<8x128xf32> to vector<1x8x128xf32>
    tpu.vector_store %arg8[%34, %c0_32, %c0_33], %37 {strides = array<i32>} : memref<8x8x128xf32, #tpu.memory_space<vmem>>, vector<1x8x128xf32>,
    %c2_i32 = arith.constant 2 : i32
    %38 = arith.index_cast %c2_i32 : i32 to index
    %c0_34 = arith.constant 0 : index
    %c0_35 = arith.constant 0 : index
    %39 = vector.load %arg8[%38, %c0_34, %c0_35] : memref<8x8x128xf32, #tpu.memory_space<vmem>>, vector<1x8x128xf32>
    %40 = vector.shape_cast %39 : vector<1x8x128xf32> to vector<8x128xf32>
    %c0_36 = arith.constant 0 : index
    %c0_37 = arith.constant 0 : index
    %41 = vector.load %arg9[%c0_36, %c0_37] : memref<8x128xf32, #tpu.memory_space<vmem>>, vector<8x128xf32>
    %c0_38 = arith.constant 0 : index
    %c0_39 = arith.constant 0 : index
    %42 = vector.load %arg3[%c0_38, %c0_39] : memref<128x128xf32, #tpu.memory_space<vmem>>, vector<128x128xf32>
    %cst_40 = arith.constant dense<0.000000e+00> : vector<8x128xf32>
    %43 = tpu.matmul %41, %42, %cst_40 {dimension_numbers = #tpu.dot_dimension_numbers<[1], [0], [0], [1], [0, 0, 1, 1], [], []>} : vector<8x128xf32>, vector<128x128xf32>, vector<8x128xf32> -> vector<8x128xf32>
    %44 = arith.addf %40, %43 : vector<8x128xf32>
    %45 = math.tanh %44 : vector<8x128xf32>
    %c0_41 = arith.constant 0 : index
    %c0_42 = arith.constant 0 : index
    %46 = vector.load %arg9[%c0_41, %c0_42] : memref<8x128xf32, #tpu.memory_space<vmem>>, vector<8x128xf32>
    tpu.vector_store %arg9[%c0_41, %c0_42], %45 {strides = array<i32>} : memref<8x128xf32, #tpu.memory_space<vmem>>, vector<8x128xf32>,
    %47 = arith.index_cast %c2_i32 : i32 to index
    %c0_43 = arith.constant 0 : index
    %c0_44 = arith.constant 0 : index
    %48 = vector.load %arg8[%47, %c0_43, %c0_44] : memref<8x8x128xf32, #tpu.memory_space<vmem>>, vector<1x8x128xf32>
    %49 = vector.shape_cast %48 : vector<1x8x128xf32> to vector<8x128xf32>
    %50 = vector.shape_cast %45 : vector<8x128xf32> to vector<1x8x128xf32>
    tpu.vector_store %arg8[%47, %c0_43, %c0_44], %50 {strides = array<i32>} : memref<8x8x128xf32, #tpu.memory_space<vmem>>, vector<1x8x128xf32>,
    %c3_i32 = arith.constant 3 : i32
    %51 = arith.index_cast %c3_i32 : i32 to index
    %c0_45 = arith.constant 0 : index
    %c0_46 = arith.constant 0 : index
    %52 = vector.load %arg8[%51, %c0_45, %c0_46] : memref<8x8x128xf32, #tpu.memory_space<vmem>>, vector<1x8x128xf32>
    %53 = vector.shape_cast %52 : vector<1x8x128xf32> to vector<8x128xf32>
    %c0_47 = arith.constant 0 : index
    %c0_48 = arith.constant 0 : index
    %54 = vector.load %arg9[%c0_47, %c0_48] : memref<8x128xf32, #tpu.memory_space<vmem>>, vector<8x128xf32>
    %c0_49 = arith.constant 0 : index
    %c0_50 = arith.constant 0 : index
    %55 = vector.load %arg3[%c0_49, %c0_50] : memref<128x128xf32, #tpu.memory_space<vmem>>, vector<128x128xf32>
    %cst_51 = arith.constant dense<0.000000e+00> : vector<8x128xf32>
    %56 = tpu.matmul %54, %55, %cst_51 {dimension_numbers = #tpu.dot_dimension_numbers<[1], [0], [0], [1], [0, 0, 1, 1], [], []>} : vector<8x128xf32>, vector<128x128xf32>, vector<8x128xf32> -> vector<8x128xf32>
    %57 = arith.addf %53, %56 : vector<8x128xf32>
    %58 = math.tanh %57 : vector<8x128xf32>
    %c0_52 = arith.constant 0 : index
    %c0_53 = arith.constant 0 : index
    %59 = vector.load %arg9[%c0_52, %c0_53] : memref<8x128xf32, #tpu.memory_space<vmem>>, vector<8x128xf32>
    tpu.vector_store %arg9[%c0_52, %c0_53], %58 {strides = array<i32>} : memref<8x128xf32, #tpu.memory_space<vmem>>, vector<8x128xf32>,
    %60 = arith.index_cast %c3_i32 : i32 to index
    %c0_54 = arith.constant 0 : index
    %c0_55 = arith.constant 0 : index
    %61 = vector.load %arg8[%60, %c0_54, %c0_55] : memref<8x8x128xf32, #tpu.memory_space<vmem>>, vector<1x8x128xf32>
    %62 = vector.shape_cast %61 : vector<1x8x128xf32> to vector<8x128xf32>
    %63 = vector.shape_cast %58 : vector<8x128xf32> to vector<1x8x128xf32>
    tpu.vector_store %arg8[%60, %c0_54, %c0_55], %63 {strides = array<i32>} : memref<8x8x128xf32, #tpu.memory_space<vmem>>, vector<1x8x128xf32>,
    %c4_i32 = arith.constant 4 : i32
    %64 = arith.index_cast %c4_i32 : i32 to index
    %c0_56 = arith.constant 0 : index
    %c0_57 = arith.constant 0 : index
    %65 = vector.load %arg8[%64, %c0_56, %c0_57] : memref<8x8x128xf32, #tpu.memory_space<vmem>>, vector<1x8x128xf32>
    %66 = vector.shape_cast %65 : vector<1x8x128xf32> to vector<8x128xf32>
    %c0_58 = arith.constant 0 : index
    %c0_59 = arith.constant 0 : index
    %67 = vector.load %arg9[%c0_58, %c0_59] : memref<8x128xf32, #tpu.memory_space<vmem>>, vector<8x128xf32>
    %c0_60 = arith.constant 0 : index
    %c0_61 = arith.constant 0 : index
    %68 = vector.load %arg3[%c0_60, %c0_61] : memref<128x128xf32, #tpu.memory_space<vmem>>, vector<128x128xf32>
    %cst_62 = arith.constant dense<0.000000e+00> : vector<8x128xf32>
    %69 = tpu.matmul %67, %68, %cst_62 {dimension_numbers = #tpu.dot_dimension_numbers<[1], [0], [0], [1], [0, 0, 1, 1], [], []>} : vector<8x128xf32>, vector<128x128xf32>, vector<8x128xf32> -> vector<8x128xf32>
    %70 = arith.addf %66, %69 : vector<8x128xf32>
    %71 = math.tanh %70 : vector<8x128xf32>
    %c0_63 = arith.constant 0 : index
    %c0_64 = arith.constant 0 : index
    %72 = vector.load %arg9[%c0_63, %c0_64] : memref<8x128xf32, #tpu.memory_space<vmem>>, vector<8x128xf32>
    tpu.vector_store %arg9[%c0_63, %c0_64], %71 {strides = array<i32>} : memref<8x128xf32, #tpu.memory_space<vmem>>, vector<8x128xf32>,
    %73 = arith.index_cast %c4_i32 : i32 to index
    %c0_65 = arith.constant 0 : index
    %c0_66 = arith.constant 0 : index
    %74 = vector.load %arg8[%73, %c0_65, %c0_66] : memref<8x8x128xf32, #tpu.memory_space<vmem>>, vector<1x8x128xf32>
    %75 = vector.shape_cast %74 : vector<1x8x128xf32> to vector<8x128xf32>
    %76 = vector.shape_cast %71 : vector<8x128xf32> to vector<1x8x128xf32>
    tpu.vector_store %arg8[%73, %c0_65, %c0_66], %76 {strides = array<i32>} : memref<8x8x128xf32, #tpu.memory_space<vmem>>, vector<1x8x128xf32>,
    %c5_i32 = arith.constant 5 : i32
    %77 = arith.index_cast %c5_i32 : i32 to index
    %c0_67 = arith.constant 0 : index
    %c0_68 = arith.constant 0 : index
    %78 = vector.load %arg8[%77, %c0_67, %c0_68] : memref<8x8x128xf32, #tpu.memory_space<vmem>>, vector<1x8x128xf32>
    %79 = vector.shape_cast %78 : vector<1x8x128xf32> to vector<8x128xf32>
    %c0_69 = arith.constant 0 : index
    %c0_70 = arith.constant 0 : index
    %80 = vector.load %arg9[%c0_69, %c0_70] : memref<8x128xf32, #tpu.memory_space<vmem>>, vector<8x128xf32>
    %c0_71 = arith.constant 0 : index
    %c0_72 = arith.constant 0 : index
    %81 = vector.load %arg3[%c0_71, %c0_72] : memref<128x128xf32, #tpu.memory_space<vmem>>, vector<128x128xf32>
    %cst_73 = arith.constant dense<0.000000e+00> : vector<8x128xf32>
    %82 = tpu.matmul %80, %81, %cst_73 {dimension_numbers = #tpu.dot_dimension_numbers<[1], [0], [0], [1], [0, 0, 1, 1], [], []>} : vector<8x128xf32>, vector<128x128xf32>, vector<8x128xf32> -> vector<8x128xf32>
    %83 = arith.addf %79, %82 : vector<8x128xf32>
    %84 = math.tanh %83 : vector<8x128xf32>
    %c0_74 = arith.constant 0 : index
    %c0_75 = arith.constant 0 : index
    %85 = vector.load %arg9[%c0_74, %c0_75] : memref<8x128xf32, #tpu.memory_space<vmem>>, vector<8x128xf32>
    tpu.vector_store %arg9[%c0_74, %c0_75], %84 {strides = array<i32>} : memref<8x128xf32, #tpu.memory_space<vmem>>, vector<8x128xf32>,
    %86 = arith.index_cast %c5_i32 : i32 to index
    %c0_76 = arith.constant 0 : index
    %c0_77 = arith.constant 0 : index
    %87 = vector.load %arg8[%86, %c0_76, %c0_77] : memref<8x8x128xf32, #tpu.memory_space<vmem>>, vector<1x8x128xf32>
    %88 = vector.shape_cast %87 : vector<1x8x128xf32> to vector<8x128xf32>
    %89 = vector.shape_cast %84 : vector<8x128xf32> to vector<1x8x128xf32>
    tpu.vector_store %arg8[%86, %c0_76, %c0_77], %89 {strides = array<i32>} : memref<8x8x128xf32, #tpu.memory_space<vmem>>, vector<1x8x128xf32>,
    %c6_i32 = arith.constant 6 : i32
    %90 = arith.index_cast %c6_i32 : i32 to index
    %c0_78 = arith.constant 0 : index
    %c0_79 = arith.constant 0 : index
    %91 = vector.load %arg8[%90, %c0_78, %c0_79] : memref<8x8x128xf32, #tpu.memory_space<vmem>>, vector<1x8x128xf32>
    %92 = vector.shape_cast %91 : vector<1x8x128xf32> to vector<8x128xf32>
    %c0_80 = arith.constant 0 : index
    %c0_81 = arith.constant 0 : index
    %93 = vector.load %arg9[%c0_80, %c0_81] : memref<8x128xf32, #tpu.memory_space<vmem>>, vector<8x128xf32>
    %c0_82 = arith.constant 0 : index
    %c0_83 = arith.constant 0 : index
    %94 = vector.load %arg3[%c0_82, %c0_83] : memref<128x128xf32, #tpu.memory_space<vmem>>, vector<128x128xf32>
    %cst_84 = arith.constant dense<0.000000e+00> : vector<8x128xf32>
    %95 = tpu.matmul %93, %94, %cst_84 {dimension_numbers = #tpu.dot_dimension_numbers<[1], [0], [0], [1], [0, 0, 1, 1], [], []>} : vector<8x128xf32>, vector<128x128xf32>, vector<8x128xf32> -> vector<8x128xf32>
    %96 = arith.addf %92, %95 : vector<8x128xf32>
    %97 = math.tanh %96 : vector<8x128xf32>
    %c0_85 = arith.constant 0 : index
    %c0_86 = arith.constant 0 : index
    %98 = vector.load %arg9[%c0_85, %c0_86] : memref<8x128xf32, #tpu.memory_space<vmem>>, vector<8x128xf32>
    tpu.vector_store %arg9[%c0_85, %c0_86], %97 {strides = array<i32>} : memref<8x128xf32, #tpu.memory_space<vmem>>, vector<8x128xf32>,
    %99 = arith.index_cast %c6_i32 : i32 to index
    %c0_87 = arith.constant 0 : index
    %c0_88 = arith.constant 0 : index
    %100 = vector.load %arg8[%99, %c0_87, %c0_88] : memref<8x8x128xf32, #tpu.memory_space<vmem>>, vector<1x8x128xf32>
    %101 = vector.shape_cast %100 : vector<1x8x128xf32> to vector<8x128xf32>
    %102 = vector.shape_cast %97 : vector<8x128xf32> to vector<1x8x128xf32>
    tpu.vector_store %arg8[%99, %c0_87, %c0_88], %102 {strides = array<i32>} : memref<8x8x128xf32, #tpu.memory_space<vmem>>, vector<1x8x128xf32>,
    %c7_i32 = arith.constant 7 : i32
    %103 = arith.index_cast %c7_i32 : i32 to index
    %c0_89 = arith.constant 0 : index
    %c0_90 = arith.constant 0 : index
    %104 = vector.load %arg8[%103, %c0_89, %c0_90] : memref<8x8x128xf32, #tpu.memory_space<vmem>>, vector<1x8x128xf32>
    %105 = vector.shape_cast %104 : vector<1x8x128xf32> to vector<8x128xf32>
    %c0_91 = arith.constant 0 : index
    %c0_92 = arith.constant 0 : index
    %106 = vector.load %arg9[%c0_91, %c0_92] : memref<8x128xf32, #tpu.memory_space<vmem>>, vector<8x128xf32>
    %c0_93 = arith.constant 0 : index
    %c0_94 = arith.constant 0 : index
    %107 = vector.load %arg3[%c0_93, %c0_94] : memref<128x128xf32, #tpu.memory_space<vmem>>, vector<128x128xf32>
    %cst_95 = arith.constant dense<0.000000e+00> : vector<8x128xf32>
    %108 = tpu.matmul %106, %107, %cst_95 {dimension_numbers = #tpu.dot_dimension_numbers<[1], [0], [0], [1], [0, 0, 1, 1], [], []>} : vector<8x128xf32>, vector<128x128xf32>, vector<8x128xf32> -> vector<8x128xf32>
    %109 = arith.addf %105, %108 : vector<8x128xf32>
    %110 = math.tanh %109 : vector<8x128xf32>
    %c0_96 = arith.constant 0 : index
    %c0_97 = arith.constant 0 : index
    %111 = vector.load %arg9[%c0_96, %c0_97] : memref<8x128xf32, #tpu.memory_space<vmem>>, vector<8x128xf32>
    tpu.vector_store %arg9[%c0_96, %c0_97], %110 {strides = array<i32>} : memref<8x128xf32, #tpu.memory_space<vmem>>, vector<8x128xf32>,
    %112 = arith.index_cast %c7_i32 : i32 to index
    %c0_98 = arith.constant 0 : index
    %c0_99 = arith.constant 0 : index
    %113 = vector.load %arg8[%112, %c0_98, %c0_99] : memref<8x8x128xf32, #tpu.memory_space<vmem>>, vector<1x8x128xf32>
    %114 = vector.shape_cast %113 : vector<1x8x128xf32> to vector<8x128xf32>
    %115 = vector.shape_cast %110 : vector<8x128xf32> to vector<1x8x128xf32>
    tpu.vector_store %arg8[%112, %c0_98, %c0_99], %115 {strides = array<i32>} : memref<8x8x128xf32, #tpu.memory_space<vmem>>, vector<1x8x128xf32>,
    %c8_i32 = arith.constant 8 : i32
    %c0_100 = arith.constant 0 : index
    %c0_101 = arith.constant 0 : index
    %c0_102 = arith.constant 0 : index
    %116 = vector.load %arg8[%c0_100, %c0_101, %c0_102] : memref<8x8x128xf32, #tpu.memory_space<vmem>>, vector<8x8x128xf32>
    %c0_103 = arith.constant 0 : index
    %c0_104 = arith.constant 0 : index
    %117 = vector.load %arg5[%c0_103, %c0_104] : memref<1x128xf32, #tpu.memory_space<vmem>>, vector<1x128xf32>
    %118 = vector.shape_cast %117 : vector<1x128xf32> to vector<1x1x128xf32>
    %119 = vector.broadcast %118 : vector<1x1x128xf32> to vector<8x8x128xf32>
    %120 = arith.mulf %116, %119 : vector<8x8x128xf32>
    %cst_105 = arith.constant dense<0.000000e+00> : vector<8x8xf32>
    %121 = vector.multi_reduction <add>, %120, %cst_105 [2] : vector<8x8x128xf32> to vector<8x8xf32>
    %c0_106 = arith.constant 0 : index
    %c0_107 = arith.constant 0 : index
    %122 = vector.load %arg6[%c0_106, %c0_107] : memref<1x1xf32, #tpu.memory_space<vmem>>, vector<1x1xf32>
    %123 = vector.broadcast %122 : vector<1x1xf32> to vector<8x8xf32>
    %124 = arith.addf %121, %123 : vector<8x8xf32>
    %c0_108 = arith.constant 0 : index
    %c0_109 = arith.constant 0 : index
    %c0_110 = arith.constant 0 : index
    %125 = vector.load %arg7[%c0_108, %c0_109, %c0_110] : memref<1x8x8xf32, #tpu.memory_space<vmem>>, vector<1x8x8xf32>
    %126 = vector.shape_cast %125 : vector<1x8x8xf32> to vector<8x8xf32>
    %127 = vector.shape_cast %124 : vector<8x8xf32> to vector<1x8x8xf32>
    tpu.vector_store %arg7[%c0_108, %c0_109, %c0_110], %127 {strides = array<i32>} : memref<1x8x8xf32, #tpu.memory_space<vmem>>, vector<1x8x8xf32>,
    return
  }
  func.func @transform_0(%arg0: i32) -> (i32, i32, i32) {
    %c0_i32 = arith.constant 0 : i32
    %c0_i32_0 = arith.constant 0 : i32
    %c0_i32_1 = arith.constant 0 : i32
    return %c0_i32, %arg0, %c0_i32_0 : i32, i32, i32
  }
  func.func @transform_1(%arg0: i32) -> (i32, i32) {
    %c0_i32 = arith.constant 0 : i32
    %c0_i32_0 = arith.constant 0 : i32
    %c0_i32_1 = arith.constant 0 : i32
    return %c0_i32, %c0_i32_0 : i32, i32
  }
  func.func @transform_2(%arg0: i32) -> (i32, i32) {
    %c0_i32 = arith.constant 0 : i32
    %c0_i32_0 = arith.constant 0 : i32
    %c0_i32_1 = arith.constant 0 : i32
    return %c0_i32, %c0_i32_0 : i32, i32
  }
  func.func @transform_3(%arg0: i32) -> (i32, i32) {
    %c0_i32 = arith.constant 0 : i32
    %c0_i32_0 = arith.constant 0 : i32
    %c0_i32_1 = arith.constant 0 : i32
    return %c0_i32, %c0_i32_0 : i32, i32
  }
  func.func @transform_4(%arg0: i32) -> (i32, i32) {
    %c0_i32 = arith.constant 0 : i32
    %c0_i32_0 = arith.constant 0 : i32
    %c0_i32_1 = arith.constant 0 : i32
    return %c0_i32, %c0_i32_0 : i32, i32
  }
  func.func @transform_5(%arg0: i32) -> (i32, i32) {
    %c0_i32 = arith.constant 0 : i32
    %c0_i32_0 = arith.constant 0 : i32
    %c0_i32_1 = arith.constant 0 : i32
    return %c0_i32, %c0_i32_0 : i32, i32
  }
  func.func @transform_6(%arg0: i32) -> (i32, i32, i32) {
    %c0_i32 = arith.constant 0 : i32
    %c0_i32_0 = arith.constant 0 : i32
    %c0_i32_1 = arith.constant 0 : i32
    return %arg0, %c0_i32, %c0_i32_0 : i32, i32, i32
  }
}

</mosaic_0001>

<llo_original>
// kernel: tpu_custom_call.1
$region0: #{tpu_custom_call.1}
  #allocation0 [shape = 'u32[]', space=smem, size = 0x4, offset = 0x4, fixed_abs, tag = 'smem constant byte address 0x4 - core index']
  #allocation1 [shape = 'u32[144,128]{1,0:T(1,128)}', space=vmem, size = 0x12000, scoped, tag = 'internal scratch']
  #allocation2 [shape = 'f32[8,8,128]{2,1,0:T(8,128)}', space=vmem, size = 0x8000, scoped, tag = 'scratch operand']
  #allocation3 [shape = 'f32[8,128]{1,0:T(8,128)}', space=vmem, size = 0x1000, scoped, tag = 'scratch operand']
  #allocation4 [shape = 'f32[1,1]{1,0:T(1,128)S(1)}', space=vmem, size = 0x200, scoped, tag = 'scoped memory for tpu_custom_call.1']
  %s0 = inlined_call_operand.hbm [shape: f32[8,8,128], index: 0, kind: input, shape index: {}]
  %s1 = inlined_call_operand.hbm [shape: f32[128,128], index: 1, kind: input, shape index: {}]
  %s2 = inlined_call_operand.hbm [shape: f32[128,128], index: 2, kind: input, shape index: {}]
  %s3 = inlined_call_operand.hbm [shape: f32[1,128], index: 3, kind: input, shape index: {}]
  %s4 = inlined_call_operand.hbm [shape: f32[1,128], index: 4, kind: input, shape index: {}]
  %s5 = inlined_call_operand.<no memory space> [shape: f32[1,1], index: 5, kind: input, shape index: {}]
  %s6 = inlined_call_operand.hbm [shape: f32[1,8,8], index: 6, kind: output, shape index: {}]
  %s7 = sld [smem:[#allocation0]]
  $region54: #{tpu_custom_call.1} parent=0
    _
  %s9 = ssub.s32 1, %s7
  %s10 = scalar_select 0, %s9, %s7
  %v11 = vstv %s5
  %12 = vst [vmem:[#allocation4] sm:$0x1] %v11
  $region1: #{tpu_custom_call.1} parent=0
    #allocation5 [shape = 'u8[32768]{0}', space=vmem, size = 0x8000, scoped, tag = 'input window, operand 0, single buffered']
    #allocation6 [shape = 's32[1]{0}', space=sflag, size = 0x4, scoped, tag = 'scoped memory for tpu_custom_call.1']
    #allocation7 [shape = 's32[1]{0}', space=sflag, size = 0x4, scoped, tag = 'scoped memory for tpu_custom_call.1']
    #allocation8 [shape = 'u8[65536]{0}', space=vmem, size = 0x10000, scoped, tag = 'input window, operand 1, single buffered']
    #allocation9 [shape = 's32[1]{0}', space=sflag, size = 0x4, scoped, tag = 'scoped memory for tpu_custom_call.1']
    #allocation10 [shape = 'u8[65536]{0}', space=vmem, size = 0x10000, scoped, tag = 'input window, operand 2, single buffered']
    #allocation11 [shape = 'u8[512]{0}', space=vmem, size = 0x400, scoped, tag = 'input window, operand 3, single buffered']
    #allocation12 [shape = 's32[1]{0}', space=sflag, size = 0x4, scoped, tag = 'scoped memory for tpu_custom_call.1']
    #allocation13 [shape = 'u8[512]{0}', space=vmem, size = 0x400, scoped, tag = 'input window, operand 4, single buffered']
    #allocation14 [shape = 'u8[4096]{0}', space=vmem, size = 0x1000, scoped, tag = 'output window, operand 0, single buffered']
    %13 = vsyncpa [#allocation6], 0
    %14 = vsyncpa [#allocation9], 0
    %15 = vsyncpa [#allocation12], 0
    %16 = vsyncpa [#allocation7], 0
    // Predicated region
    $region2: #{tpu_custom_call.1} parent=1 // pred_check
      _
    $region3: #{tpu_custom_call.1} parent=1 // pred_check_branch
      %18 = sbr.rel (0) target = $region5
    $region4: #{tpu_custom_call.1} parent=1 // pred_region
      %s20 = ssub.s32 1024, 1024
      %21 = vsyncadd [#allocation6], %s20
      %s22 = sshll.u32 [#allocation5], 4
      %s23 = int_to_ptr.vmem [resolvable:$true] %s22
      %28 = dma.hbm_to_vmem [thread:$0]  %s0, 1024, %s23, [#allocation6], 128, 128, 8
    $region5: #{tpu_custom_call.1} parent=1 // pred_fallthru
      _
    // Predicated region
    $region6: #{tpu_custom_call.1} parent=1 // pred_check
      _
    $region7: #{tpu_custom_call.1} parent=1 // pred_check_branch
      %30 = sbr.rel (0) target = $region9
    $region8: #{tpu_custom_call.1} parent=1 // pred_region
      %s32 = ssub.s32 2048, 2048
      %33 = vsyncadd [#allocation9], %s32
      %s34 = sshll.u32 [#allocation8], 4
      %s35 = int_to_ptr.vmem [resolvable:$true] %s34
      %40 = dma.hbm_to_vmem [thread:$0]  %s1, 2048, %s35, [#allocation9], 128, 128, 8
    $region9: #{tpu_custom_call.1} parent=1 // pred_fallthru
      _
    // Predicated region
    $region10: #{tpu_custom_call.1} parent=1 // pred_check
      _
    $region11: #{tpu_custom_call.1} parent=1 // pred_check_branch
      %42 = sbr.rel (0) target = $region13
    $region12: #{tpu_custom_call.1} parent=1 // pred_region
      %s44 = ssub.s32 2048, 2048
      %45 = vsyncadd [#allocation9], %s44
      %s46 = sshll.u32 [#allocation10], 4
      %s47 = int_to_ptr.vmem [resolvable:$true] %s46
      %52 = dma.hbm_to_vmem [thread:$0]  %s2, 2048, %s47, [#allocation9], 128, 128, 8
    $region13: #{tpu_custom_call.1} parent=1 // pred_fallthru
      _
    // Predicated region
    $region14: #{tpu_custom_call.1} parent=1 // pred_check
      _
    $region15: #{tpu_custom_call.1} parent=1 // pred_check_branch
      %54 = sbr.rel (0) target = $region17
    $region16: #{tpu_custom_call.1} parent=1 // pred_region
      %s56 = ssub.s32 16, 16
      %57 = vsyncadd [#allocation12], %s56
      %s59 = sshll.u32 [#allocation11], 4
      %s60 = int_to_ptr.vmem [resolvable:$true] %s59
      %62 = dma.hbm_to_vmem [thread:$0]  %s3, 16, %s60, [#allocation12]
    $region17: #{tpu_custom_call.1} parent=1 // pred_fallthru
      _
    // Predicated region
    $region18: #{tpu_custom_call.1} parent=1 // pred_check
      _
    $region19: #{tpu_custom_call.1} parent=1 // pred_check_branch
      %64 = sbr.rel (0) target = $region21
    $region20: #{tpu_custom_call.1} parent=1 // pred_region
      %s66 = ssub.s32 16, 16
      %67 = vsyncadd [#allocation12], %s66
      %s69 = sshll.u32 [#allocation13], 4
      %s70 = int_to_ptr.vmem [resolvable:$true] %s69
      %72 = dma.hbm_to_vmem [thread:$0]  %s4, 16, %s70, [#allocation12]
    $region21: #{tpu_custom_call.1} parent=1 // pred_fallthru
      _
    // Predicated region
    $region22: #{tpu_custom_call.1} parent=1 // pred_check
      _
    $region23: #{tpu_custom_call.1} parent=1 // pred_check_branch
      %74 = sbr.rel (0) target = $region25
    $region24: #{tpu_custom_call.1} parent=1 // pred_region
      _
    $region25: #{tpu_custom_call.1} parent=1 // pred_fallthru
      _
    // Predicated region
    $region26: #{tpu_custom_call.1} parent=1 // pred_check
      _
    $region27: #{tpu_custom_call.1} parent=1 // pred_check_branch
      %76 = sbr.rel (0) target = $region29
    $region28: #{tpu_custom_call.1} parent=1 // pred_region
      %77 = dma.done [#allocation6], 1024
    $region29: #{tpu_custom_call.1} parent=1 // pred_fallthru
      _
    // Predicated region
    $region30: #{tpu_custom_call.1} parent=1 // pred_check
      _
    $region31: #{tpu_custom_call.1} parent=1 // pred_check_branch
      %79 = sbr.rel (0) target = $region33
    $region32: #{tpu_custom_call.1} parent=1 // pred_region
      %80 = dma.done [#allocation9], 2048
    $region33: #{tpu_custom_call.1} parent=1 // pred_fallthru
      _
    // Predicated region
    $region34: #{tpu_custom_call.1} parent=1 // pred_check
      _
    $region35: #{tpu_custom_call.1} parent=1 // pred_check_branch
      %82 = sbr.rel (0) target = $region37
    $region36: #{tpu_custom_call.1} parent=1 // pred_region
      %83 = dma.done [#allocation9], 2048
    $region37: #{tpu_custom_call.1} parent=1 // pred_fallthru
      _
    // Predicated region
    $region38: #{tpu_custom_call.1} parent=1 // pred_check
      _
    $region39: #{tpu_custom_call.1} parent=1 // pred_check_branch
      %85 = sbr.rel (0) target = $region41
    $region40: #{tpu_custom_call.1} parent=1 // pred_region
      %86 = dma.done [#allocation12], 16
    $region41: #{tpu_custom_call.1} parent=1 // pred_fallthru
      _
    // Predicated region
    $region42: #{tpu_custom_call.1} parent=1 // pred_check
      _
    $region43: #{tpu_custom_call.1} parent=1 // pred_check_branch
      %88 = sbr.rel (0) target = $region45
    $region44: #{tpu_custom_call.1} parent=1 // pred_region
      %89 = dma.done [#allocation12], 16
    $region45: #{tpu_custom_call.1} parent=1 // pred_fallthru
      _
    %v90 = vld [vmem:[#allocation5] sm:$0xff]
    %v91 = vld [vmem:[#allocation5 + $0x8] sm:$0xff]
    %v92 = vld [vmem:[#allocation5 + $0x10] sm:$0xff]
    %v93 = vld [vmem:[#allocation5 + $0x18] sm:$0xff]
    %v94 = vld [vmem:[#allocation5 + $0x20] sm:$0xff]
    %v95 = vld [vmem:[#allocation5 + $0x28] sm:$0xff]
    %v96 = vld [vmem:[#allocation5 + $0x30] sm:$0xff]
    %v97 = vld [vmem:[#allocation5 + $0x38] sm:$0xff]
    %v98 = vld [vmem:[#allocation8] sm:$0xff]
    %v99 = vld [vmem:[#allocation8 + $0x8] sm:$0xff]
    %v100 = vld [vmem:[#allocation8 + $0x10] sm:$0xff]
    %v101 = vld [vmem:[#allocation8 + $0x18] sm:$0xff]
    %v102 = vld [vmem:[#allocation8 + $0x20] sm:$0xff]
    %v103 = vld [vmem:[#allocation8 + $0x28] sm:$0xff]
    %v104 = vld [vmem:[#allocation8 + $0x30] sm:$0xff]
    %v105 = vld [vmem:[#allocation8 + $0x38] sm:$0xff]
    %v106 = vld [vmem:[#allocation8 + $0x40] sm:$0xff]
    %v107 = vld [vmem:[#allocation8 + $0x48] sm:$0xff]
    %v108 = vld [vmem:[#allocation8 + $0x50] sm:$0xff]
    %v109 = vld [vmem:[#allocation8 + $0x58] sm:$0xff]
    %v110 = vld [vmem:[#allocation8 + $0x60] sm:$0xff]
    %v111 = vld [vmem:[#allocation8 + $0x68] sm:$0xff]
    %v112 = vld [vmem:[#allocation8 + $0x70] sm:$0xff]
    %v113 = vld [vmem:[#allocation8 + $0x78] sm:$0xff]
    %114 = vmatprep.subr.mxu0 0.0
    %115 = vmatpush1.msra.mxu0 %v98
    %116 = vmatprep.subr.mxu0 0.0
    %117 = vmatpush1.msra.mxu0 %v99
    %118 = vmatprep.subr.mxu0 0.0
    %119 = vmatpush1.msra.mxu0 %v100
    %120 = vmatprep.subr.mxu0 0.0
    %121 = vmatpush1.msra.mxu0 %v101
    %122 = vmatprep.subr.mxu0 0.0
    %123 = vmatpush1.msra.mxu0 %v102
    %124 = vmatprep.subr.mxu0 0.0
    %125 = vmatpush1.msra.mxu0 %v103
    %126 = vmatprep.subr.mxu0 0.0
    %127 = vmatpush1.msra.mxu0 %v104
    %128 = vmatprep.subr.mxu0 0.0
    %129 = vmatpush1.msra.mxu0 %v105
    %130 = vmatprep.subr.mxu0 0.0
    %131 = vmatpush1.msra.mxu0 %v106
    %132 = vmatprep.subr.mxu0 0.0
    %133 = vmatpush1.msra.mxu0 %v107
    %134 = vmatprep.subr.mxu0 0.0
    %135 = vmatpush1.msra.mxu0 %v108
    %136 = vmatprep.subr.mxu0 0.0
    %137 = vmatpush1.msra.mxu0 %v109
    %138 = vmatprep.subr.mxu0 0.0
    %139 = vmatpush1.msra.mxu0 %v110
    %140 = vmatprep.subr.mxu0 0.0
    %141 = vmatpush1.msra.mxu0 %v111
    %142 = vmatprep.subr.mxu0 0.0
    %143 = vmatpush1.msra.mxu0 %v112
    %144 = vmatprep.subr.mxu0 0.0
    %145 = vmatpush1.msra.mxu0 %v113
    %146 = vmatprep.subr.mxu0 0.0
    %147 = vmatpush1.msra.mxu0 0.0
    %148 = vmatprep.subr.mxu0 0.0
    %149 = vmatpush1.msra.mxu0 0.0
    %150 = vmatprep.subr.mxu0 0.0
    %151 = vmatpush1.msra.mxu0 0.0
    %152 = vmatprep.subr.mxu0 0.0
    %153 = vmatpush1.msra.mxu0 0.0
    %154 = vmatprep.subr.mxu0 0.0
    %155 = vmatpush1.msra.mxu0 0.0
    %156 = vmatprep.subr.mxu0 0.0
    %157 = vmatpush1.msra.mxu0 0.0
    %158 = vmatprep.subr.mxu0 0.0
    %159 = vmatpush1.msra.mxu0 0.0
    %160 = vmatprep.subr.mxu0 0.0
    %161 = vmatpush1.msra.mxu0 0.0
    %162 = vmatprep.subr.mxu0 0.0
    %163 = vmatpush1.msra.mxu0 0.0
    %164 = vmatprep.subr.mxu0 0.0
    %165 = vmatpush1.msra.mxu0 0.0
    %166 = vmatprep.subr.mxu0 0.0
    %167 = vmatpush1.msra.mxu0 0.0
    %168 = vmatprep.subr.mxu0 0.0
    %169 = vmatpush1.msra.mxu0 0.0
    %170 = vmatprep.subr.mxu0 0.0
    %171 = vmatpush1.msra.mxu0 0.0
    %172 = vmatprep.subr.mxu0 0.0
    %173 = vmatpush1.msra.mxu0 0.0
    %174 = vmatprep.subr.mxu0 0.0
    %175 = vmatpush1.msra.mxu0 0.0
    %176 = vmatprep.subr.mxu0 0.0
    %177 = vmatpush1.msra.mxu0 0.0
    %178 = vmatprep.mubr.f32.mxu0 0.0
    %179 = vmatmul.mubr.f32.gmra.mrb[0].mxu0 %v90
    %v180 = vpop.f32.mrb[0].mxu0
    %v181 = vadd.f32 0.0, %v180
    %v182 = vpop.f32.mrb[0].mxu0
    %183 = vmatprep.mubr.f32.mxu0 0.0
    %184 = vmatmul.mubr.f32.gmra.mrb[0].mxu0 %v91
    %v185 = vpop.f32.mrb[0].mxu0
    %v186 = vadd.f32 0.0, %v185
    %v187 = vpop.f32.mrb[0].mxu0
    %188 = vmatprep.mubr.f32.mxu0 0.0
    %189 = vmatmul.mubr.f32.gmra.mrb[0].mxu0 %v92
    %v190 = vpop.f32.mrb[0].mxu0
    %v191 = vadd.f32 0.0, %v190
    %v192 = vpop.f32.mrb[0].mxu0
    %193 = vmatprep.mubr.f32.mxu0 0.0
    %194 = vmatmul.mubr.f32.gmra.mrb[0].mxu0 %v93
    %v195 = vpop.f32.mrb[0].mxu0
    %v196 = vadd.f32 0.0, %v195
    %v197 = vpop.f32.mrb[0].mxu0
    %198 = vmatprep.mubr.f32.mxu0 0.0
    %199 = vmatmul.mubr.f32.gmra.mrb[0].mxu0 %v94
    %v200 = vpop.f32.mrb[0].mxu0
    %v201 = vadd.f32 0.0, %v200
    %v202 = vpop.f32.mrb[0].mxu0
    %203 = vmatprep.mubr.f32.mxu0 0.0
    %204 = vmatmul.mubr.f32.gmra.mrb[0].mxu0 %v95
    %v205 = vpop.f32.mrb[0].mxu0
    %v206 = vadd.f32 0.0, %v205
    %v207 = vpop.f32.mrb[0].mxu0
    %208 = vmatprep.mubr.f32.mxu0 0.0
    %209 = vmatmul.mubr.f32.gmra.mrb[0].mxu0 %v96
    %v210 = vpop.f32.mrb[0].mxu0
    %v211 = vadd.f32 0.0, %v210
    %v212 = vpop.f32.mrb[0].mxu0
    %213 = vmatprep.mubr.f32.mxu0 0.0
    %214 = vmatmul.mubr.f32.gmra.mrb[0].mxu0 %v97
    %v215 = vpop.f32.mrb[0].mxu0
    %v216 = vadd.f32 0.0, %v215
    %v217 = vpop.f32.mrb[0].mxu0
    %218 = vdwg.mxu0
    %v219 = vld [vmem:[#allocation11] sm:$0x1]
    %v221 = vlaneseq
    %v222 = vshrl.u32 %v221, 7
    %v223 = vsub.s32 0, %v222
    %v224 = vrot.slane %v219, %v223
    %v226 = vadd.f32 %v181, %v224
    %v227 = vadd.f32 %v186, %v224
    %v228 = vadd.f32 %v191, %v224
    %v229 = vadd.f32 %v196, %v224
    %v230 = vadd.f32 %v201, %v224
    %v231 = vadd.f32 %v206, %v224
    %v232 = vadd.f32 %v211, %v224
    %v233 = vadd.f32 %v216, %v224
    %234 = vst [vmem:[#allocation2] sm:$0xff] %v226
    %235 = vst [vmem:[#allocation2 + $0x8] sm:$0xff] %v227
    %236 = vst [vmem:[#allocation2 + $0x10] sm:$0xff] %v228
    %237 = vst [vmem:[#allocation2 + $0x18] sm:$0xff] %v229
    %238 = vst [vmem:[#allocation2 + $0x20] sm:$0xff] %v230
    %239 = vst [vmem:[#allocation2 + $0x28] sm:$0xff] %v231
    %240 = vst [vmem:[#allocation2 + $0x30] sm:$0xff] %v232
    %241 = vst [vmem:[#allocation2 + $0x38] sm:$0xff] %v233
    %242 = vst [vmem:[#allocation3] sm:$0xff] 0.0
    %v243 = vld [vmem:[#allocation2] sm:$0xff]
    %v244 = vld [vmem:[#allocation3] sm:$0xff]
    %v245 = vld [vmem:[#allocation10] sm:$0xff]
    %v246 = vld [vmem:[#allocation10 + $0x8] sm:$0xff]
    %v247 = vld [vmem:[#allocation10 + $0x10] sm:$0xff]
    %v248 = vld [vmem:[#allocation10 + $0x18] sm:$0xff]
    %v249 = vld [vmem:[#allocation10 + $0x20] sm:$0xff]
    %v250 = vld [vmem:[#allocation10 + $0x28] sm:$0xff]
    %v251 = vld [vmem:[#allocation10 + $0x30] sm:$0xff]
    %v252 = vld [vmem:[#allocation10 + $0x38] sm:$0xff]
    %v253 = vld [vmem:[#allocation10 + $0x40] sm:$0xff]
    %v254 = vld [vmem:[#allocation10 + $0x48] sm:$0xff]
    %v255 = vld [vmem:[#allocation10 + $0x50] sm:$0xff]
    %v256 = vld [vmem:[#allocation10 + $0x58] sm:$0xff]
    %v257 = vld [vmem:[#allocation10 + $0x60] sm:$0xff]
    %v258 = vld [vmem:[#allocation10 + $0x68] sm:$0xff]
    %v259 = vld [vmem:[#allocation10 + $0x70] sm:$0xff]
    %v260 = vld [vmem:[#allocation10 + $0x78] sm:$0xff]
    %261 = vmatprep.subr.mxu0 0.0
    %262 = vmatpush1.msra.mxu0 %v245
    %263 = vmatprep.subr.mxu0 0.0
    %264 = vmatpush1.msra.mxu0 %v246
    %265 = vmatprep.subr.mxu0 0.0
    %266 = vmatpush1.msra.mxu0 %v247
    %267 = vmatprep.subr.mxu0 0.0
    %268 = vmatpush1.msra.mxu0 %v248
    %269 = vmatprep.subr.mxu0 0.0
    %270 = vmatpush1.msra.mxu0 %v249
    %271 = vmatprep.subr.mxu0 0.0
    %272 = vmatpush1.msra.mxu0 %v250
    %273 = vmatprep.subr.mxu0 0.0
    %274 = vmatpush1.msra.mxu0 %v251
    %275 = vmatprep.subr.mxu0 0.0
    %276 = vmatpush1.msra.mxu0 %v252
    %277 = vmatprep.subr.mxu0 0.0
    %278 = vmatpush1.msra.mxu0 %v253
    %279 = vmatprep.subr.mxu0 0.0
    %280 = vmatpush1.msra.mxu0 %v254
    %281 = vmatprep.subr.mxu0 0.0
    %282 = vmatpush1.msra.mxu0 %v255
    %283 = vmatprep.subr.mxu0 0.0
    %284 = vmatpush1.msra.mxu0 %v256
    %285 = vmatprep.subr.mxu0 0.0
    %286 = vmatpush1.msra.mxu0 %v257
    %287 = vmatprep.subr.mxu0 0.0
    %288 = vmatpush1.msra.mxu0 %v258
    %289 = vmatprep.subr.mxu0 0.0
    %290 = vmatpush1.msra.mxu0 %v259
    %291 = vmatprep.subr.mxu0 0.0
    %292 = vmatpush1.msra.mxu0 %v260
    %293 = vmatprep.subr.mxu0 0.0
    %294 = vmatpush1.msra.mxu0 0.0
    %295 = vmatprep.subr.mxu0 0.0
    %296 = vmatpush1.msra.mxu0 0.0
    %297 = vmatprep.subr.mxu0 0.0
    %298 = vmatpush1.msra.mxu0 0.0
    %299 = vmatprep.subr.mxu0 0.0
    %300 = vmatpush1.msra.mxu0 0.0
    %301 = vmatprep.subr.mxu0 0.0
    %302 = vmatpush1.msra.mxu0 0.0
    %303 = vmatprep.subr.mxu0 0.0
    %304 = vmatpush1.msra.mxu0 0.0
    %305 = vmatprep.subr.mxu0 0.0
    %306 = vmatpush1.msra.mxu0 0.0
    %307 = vmatprep.subr.mxu0 0.0
    %308 = vmatpush1.msra.mxu0 0.0
    %309 = vmatprep.subr.mxu0 0.0
    %310 = vmatpush1.msra.mxu0 0.0
    %311 = vmatprep.subr.mxu0 0.0
    %312 = vmatpush1.msra.mxu0 0.0
    %313 = vmatprep.subr.mxu0 0.0
    %314 = vmatpush1.msra.mxu0 0.0
    %315 = vmatprep.subr.mxu0 0.0
    %316 = vmatpush1.msra.mxu0 0.0
    %317 = vmatprep.subr.mxu0 0.0
    %318 = vmatpush1.msra.mxu0 0.0
    %319 = vmatprep.subr.mxu0 0.0
    %320 = vmatpush1.msra.mxu0 0.0
    %321 = vmatprep.subr.mxu0 0.0
    %322 = vmatpush1.msra.mxu0 0.0
    %323 = vmatprep.subr.mxu0 0.0
    %324 = vmatpush1.msra.mxu0 0.0
    %325 = vmatprep.mubr.f32.mxu0 0.0
    %326 = vmatmul.mubr.f32.gmra.mrb[0].mxu0 %v244
    %v327 = vpop.f32.mrb[0].mxu0
    %v328 = vadd.f32 0.0, %v327
    %v329 = vpop.f32.mrb[0].mxu0
    %330 = vdwg.mxu0
    %v331 = vadd.f32 %v243, %v328
    %v332 = vtanh.pop %v331
    %333 = vst [vmem:[#allocation3] sm:$0xff] %v332
    %334 = vst [vmem:[#allocation2] sm:$0xff] %v332
    %s335 = scalar_lea.vmem [#allocation2], 8
    %v336 = vld [vmem:[%s335] sm:$0xff]
    %v337 = vld [vmem:[#allocation3] sm:$0xff]
    %v338 = vld [vmem:[#allocation10] sm:$0xff]
    %v339 = vld [vmem:[#allocation10 + $0x8] sm:$0xff]
    %v340 = vld [vmem:[#allocation10 + $0x10] sm:$0xff]
    %v341 = vld [vmem:[#allocation10 + $0x18] sm:$0xff]
    %v342 = vld [vmem:[#allocation10 + $0x20] sm:$0xff]
    %v343 = vld [vmem:[#allocation10 + $0x28] sm:$0xff]
    %v344 = vld [vmem:[#allocation10 + $0x30] sm:$0xff]
    %v345 = vld [vmem:[#allocation10 + $0x38] sm:$0xff]
    %v346 = vld [vmem:[#allocation10 + $0x40] sm:$0xff]
    %v347 = vld [vmem:[#allocation10 + $0x48] sm:$0xff]
    %v348 = vld [vmem:[#allocation10 + $0x50] sm:$0xff]
    %v349 = vld [vmem:[#allocation10 + $0x58] sm:$0xff]
    %v350 = vld [vmem:[#allocation10 + $0x60] sm:$0xff]
    %v351 = vld [vmem:[#allocation10 + $0x68] sm:$0xff]
    %v352 = vld [vmem:[#allocation10 + $0x70] sm:$0xff]
    %v353 = vld [vmem:[#allocation10 + $0x78] sm:$0xff]
    %354 = vmatprep.subr.mxu0 0.0
    %355 = vmatpush1.msra.mxu0 %v338
    %356 = vmatprep.subr.mxu0 0.0
    %357 = vmatpush1.msra.mxu0 %v339
    %358 = vmatprep.subr.mxu0 0.0
    %359 = vmatpush1.msra.mxu0 %v340
    %360 = vmatprep.subr.mxu0 0.0
    %361 = vmatpush1.msra.mxu0 %v341
    %362 = vmatprep.subr.mxu0 0.0
    %363 = vmatpush1.msra.mxu0 %v342
    %364 = vmatprep.subr.mxu0 0.0
    %365 = vmatpush1.msra.mxu0 %v343
    %366 = vmatprep.subr.mxu0 0.0
    %367 = vmatpush1.msra.mxu0 %v344
    %368 = vmatprep.subr.mxu0 0.0
    %369 = vmatpush1.msra.mxu0 %v345
    %370 = vmatprep.subr.mxu0 0.0
    %371 = vmatpush1.msra.mxu0 %v346
    %372 = vmatprep.subr.mxu0 0.0
    %373 = vmatpush1.msra.mxu0 %v347
    %374 = vmatprep.subr.mxu0 0.0
    %375 = vmatpush1.msra.mxu0 %v348
    %376 = vmatprep.subr.mxu0 0.0
    %377 = vmatpush1.msra.mxu0 %v349
    %378 = vmatprep.subr.mxu0 0.0
    %379 = vmatpush1.msra.mxu0 %v350
    %380 = vmatprep.subr.mxu0 0.0
    %381 = vmatpush1.msra.mxu0 %v351
    %382 = vmatprep.subr.mxu0 0.0
    %383 = vmatpush1.msra.mxu0 %v352
    %384 = vmatprep.subr.mxu0 0.0
    %385 = vmatpush1.msra.mxu0 %v353
    %386 = vmatprep.subr.mxu0 0.0
    %387 = vmatpush1.msra.mxu0 0.0
    %388 = vmatprep.subr.mxu0 0.0
    %389 = vmatpush1.msra.mxu0 0.0
    %390 = vmatprep.subr.mxu0 0.0
    %391 = vmatpush1.msra.mxu0 0.0
    %392 = vmatprep.subr.mxu0 0.0
    %393 = vmatpush1.msra.mxu0 0.0
    %394 = vmatprep.subr.mxu0 0.0
    %395 = vmatpush1.msra.mxu0 0.0
    %396 = vmatprep.subr.mxu0 0.0
    %397 = vmatpush1.msra.mxu0 0.0
    %398 = vmatprep.subr.mxu0 0.0
    %399 = vmatpush1.msra.mxu0 0.0
    %400 = vmatprep.subr.mxu0 0.0
    %401 = vmatpush1.msra.mxu0 0.0
    %402 = vmatprep.subr.mxu0 0.0
    %403 = vmatpush1.msra.mxu0 0.0
    %404 = vmatprep.subr.mxu0 0.0
    %405 = vmatpush1.msra.mxu0 0.0
    %406 = vmatprep.subr.mxu0 0.0
    %407 = vmatpush1.msra.mxu0 0.0
    %408 = vmatprep.subr.mxu0 0.0
    %409 = vmatpush1.msra.mxu0 0.0
    %410 = vmatprep.subr.mxu0 0.0
    %411 = vmatpush1.msra.mxu0 0.0
    %412 = vmatprep.subr.mxu0 0.0
    %413 = vmatpush1.msra.mxu0 0.0
    %414 = vmatprep.subr.mxu0 0.0
    %415 = vmatpush1.msra.mxu0 0.0
    %416 = vmatprep.subr.mxu0 0.0
    %417 = vmatpush1.msra.mxu0 0.0
    %418 = vmatprep.mubr.f32.mxu0 0.0
    %419 = vmatmul.mubr.f32.gmra.mrb[0].mxu0 %v337
    %v420 = vpop.f32.mrb[0].mxu0
    %v421 = vadd.f32 0.0, %v420
    %v422 = vpop.f32.mrb[0].mxu0
    %423 = vdwg.mxu0
    %v424 = vadd.f32 %v336, %v421
    %v425 = vtanh.pop %v424
    %426 = vst [vmem:[#allocation3] sm:$0xff] %v425
    %427 = vst [vmem:[%s335] sm:$0xff] %v425
    %s428 = scalar_lea.vmem [#allocation2], 16
    %v429 = vld [vmem:[%s428] sm:$0xff]
    %v430 = vld [vmem:[#allocation3] sm:$0xff]
    %v431 = vld [vmem:[#allocation10] sm:$0xff]
    %v432 = vld [vmem:[#allocation10 + $0x8] sm:$0xff]
    %v433 = vld [vmem:[#allocation10 + $0x10] sm:$0xff]
    %v434 = vld [vmem:[#allocation10 + $0x18] sm:$0xff]
    %v435 = vld [vmem:[#allocation10 + $0x20] sm:$0xff]
    %v436 = vld [vmem:[#allocation10 + $0x28] sm:$0xff]
    %v437 = vld [vmem:[#allocation10 + $0x30] sm:$0xff]
    %v438 = vld [vmem:[#allocation10 + $0x38] sm:$0xff]
    %v439 = vld [vmem:[#allocation10 + $0x40] sm:$0xff]
    %v440 = vld [vmem:[#allocation10 + $0x48] sm:$0xff]
    %v441 = vld [vmem:[#allocation10 + $0x50] sm:$0xff]
    %v442 = vld [vmem:[#allocation10 + $0x58] sm:$0xff]
    %v443 = vld [vmem:[#allocation10 + $0x60] sm:$0xff]
    %v444 = vld [vmem:[#allocation10 + $0x68] sm:$0xff]
    %v445 = vld [vmem:[#allocation10 + $0x70] sm:$0xff]
    %v446 = vld [vmem:[#allocation10 + $0x78] sm:$0xff]
    %447 = vmatprep.subr.mxu0 0.0
    %448 = vmatpush1.msra.mxu0 %v431
    %449 = vmatprep.subr.mxu0 0.0
    %450 = vmatpush1.msra.mxu0 %v432
    %451 = vmatprep.subr.mxu0 0.0
    %452 = vmatpush1.msra.mxu0 %v433
    %453 = vmatprep.subr.mxu0 0.0
    %454 = vmatpush1.msra.mxu0 %v434
    %455 = vmatprep.subr.mxu0 0.0
    %456 = vmatpush1.msra.mxu0 %v435
    %457 = vmatprep.subr.mxu0 0.0
    %458 = vmatpush1.msra.mxu0 %v436
    %459 = vmatprep.subr.mxu0 0.0
    %460 = vmatpush1.msra.mxu0 %v437
    %461 = vmatprep.subr.mxu0 0.0
    %462 = vmatpush1.msra.mxu0 %v438
    %463 = vmatprep.subr.mxu0 0.0
    %464 = vmatpush1.msra.mxu0 %v439
    %465 = vmatprep.subr.mxu0 0.0
    %466 = vmatpush1.msra.mxu0 %v440
    %467 = vmatprep.subr.mxu0 0.0
    %468 = vmatpush1.msra.mxu0 %v441
    %469 = vmatprep.subr.mxu0 0.0
    %470 = vmatpush1.msra.mxu0 %v442
    %471 = vmatprep.subr.mxu0 0.0
    %472 = vmatpush1.msra.mxu0 %v443
    %473 = vmatprep.subr.mxu0 0.0
    %474 = vmatpush1.msra.mxu0 %v444
    %475 = vmatprep.subr.mxu0 0.0
    %476 = vmatpush1.msra.mxu0 %v445
    %477 = vmatprep.subr.mxu0 0.0
    %478 = vmatpush1.msra.mxu0 %v446
    %479 = vmatprep.subr.mxu0 0.0
    %480 = vmatpush1.msra.mxu0 0.0
    %481 = vmatprep.subr.mxu0 0.0
    %482 = vmatpush1.msra.mxu0 0.0
    %483 = vmatprep.subr.mxu0 0.0
    %484 = vmatpush1.msra.mxu0 0.0
    %485 = vmatprep.subr.mxu0 0.0
    %486 = vmatpush1.msra.mxu0 0.0
    %487 = vmatprep.subr.mxu0 0.0
    %488 = vmatpush1.msra.mxu0 0.0
    %489 = vmatprep.subr.mxu0 0.0
    %490 = vmatpush1.msra.mxu0 0.0
    %491 = vmatprep.subr.mxu0 0.0
    %492 = vmatpush1.msra.mxu0 0.0
    %493 = vmatprep.subr.mxu0 0.0
    %494 = vmatpush1.msra.mxu0 0.0
    %495 = vmatprep.subr.mxu0 0.0
    %496 = vmatpush1.msra.mxu0 0.0
    %497 = vmatprep.subr.mxu0 0.0
    %498 = vmatpush1.msra.mxu0 0.0
    %499 = vmatprep.subr.mxu0 0.0
    %500 = vmatpush1.msra.mxu0 0.0
    %501 = vmatprep.subr.mxu0 0.0
    %502 = vmatpush1.msra.mxu0 0.0
    %503 = vmatprep.subr.mxu0 0.0
    %504 = vmatpush1.msra.mxu0 0.0
    %505 = vmatprep.subr.mxu0 0.0
    %506 = vmatpush1.msra.mxu0 0.0
    %507 = vmatprep.subr.mxu0 0.0
    %508 = vmatpush1.msra.mxu0 0.0
    %509 = vmatprep.subr.mxu0 0.0
    %510 = vmatpush1.msra.mxu0 0.0
    %511 = vmatprep.mubr.f32.mxu0 0.0
    %512 = vmatmul.mubr.f32.gmra.mrb[0].mxu0 %v430
    %v513 = vpop.f32.mrb[0].mxu0
    %v514 = vadd.f32 0.0, %v513
    %v515 = vpop.f32.mrb[0].mxu0
    %516 = vdwg.mxu0
    %v517 = vadd.f32 %v429, %v514
    %v518 = vtanh.pop %v517
    %519 = vst [vmem:[#allocation3] sm:$0xff] %v518
    %520 = vst [vmem:[%s428] sm:$0xff] %v518
    %s521 = scalar_lea.vmem [#allocation2], 24
    %v522 = vld [vmem:[%s521] sm:$0xff]
    %v523 = vld [vmem:[#allocation3] sm:$0xff]
    %v524 = vld [vmem:[#allocation10] sm:$0xff]
    %v525 = vld [vmem:[#allocation10 + $0x8] sm:$0xff]
    %v526 = vld [vmem:[#allocation10 + $0x10] sm:$0xff]
    %v527 = vld [vmem:[#allocation10 + $0x18] sm:$0xff]
    %v528 = vld [vmem:[#allocation10 + $0x20] sm:$0xff]
    %v529 = vld [vmem:[#allocation10 + $0x28] sm:$0xff]
    %v530 = vld [vmem:[#allocation10 + $0x30] sm:$0xff]
    %v531 = vld [vmem:[#allocation10 + $0x38] sm:$0xff]
    %v532 = vld [vmem:[#allocation10 + $0x40] sm:$0xff]
    %v533 = vld [vmem:[#allocation10 + $0x48] sm:$0xff]
    %v534 = vld [vmem:[#allocation10 + $0x50] sm:$0xff]
    %v535 = vld [vmem:[#allocation10 + $0x58] sm:$0xff]
    %v536 = vld [vmem:[#allocation10 + $0x60] sm:$0xff]
    %v537 = vld [vmem:[#allocation10 + $0x68] sm:$0xff]
    %v538 = vld [vmem:[#allocation10 + $0x70] sm:$0xff]
    %v539 = vld [vmem:[#allocation10 + $0x78] sm:$0xff]
    %540 = vmatprep.subr.mxu0 0.0
    %541 = vmatpush1.msra.mxu0 %v524
    %542 = vmatprep.subr.mxu0 0.0
    %543 = vmatpush1.msra.mxu0 %v525
    %544 = vmatprep.subr.mxu0 0.0
    %545 = vmatpush1.msra.mxu0 %v526
    %546 = vmatprep.subr.mxu0 0.0
    %547 = vmatpush1.msra.mxu0 %v527
    %548 = vmatprep.subr.mxu0 0.0
    %549 = vmatpush1.msra.mxu0 %v528
    %550 = vmatprep.subr.mxu0 0.0
    %551 = vmatpush1.msra.mxu0 %v529
    %552 = vmatprep.subr.mxu0 0.0
    %553 = vmatpush1.msra.mxu0 %v530
    %554 = vmatprep.subr.mxu0 0.0
    %555 = vmatpush1.msra.mxu0 %v531
    %556 = vmatprep.subr.mxu0 0.0
    %557 = vmatpush1.msra.mxu0 %v532
    %558 = vmatprep.subr.mxu0 0.0
    %559 = vmatpush1.msra.mxu0 %v533
    %560 = vmatprep.subr.mxu0 0.0
    %561 = vmatpush1.msra.mxu0 %v534
    %562 = vmatprep.subr.mxu0 0.0
    %563 = vmatpush1.msra.mxu0 %v535
    %564 = vmatprep.subr.mxu0 0.0
    %565 = vmatpush1.msra.mxu0 %v536
    %566 = vmatprep.subr.mxu0 0.0
    %567 = vmatpush1.msra.mxu0 %v537
    %568 = vmatprep.subr.mxu0 0.0
    %569 = vmatpush1.msra.mxu0 %v538
    %570 = vmatprep.subr.mxu0 0.0
    %571 = vmatpush1.msra.mxu0 %v539
    %572 = vmatprep.subr.mxu0 0.0
    %573 = vmatpush1.msra.mxu0 0.0
    %574 = vmatprep.subr.mxu0 0.0
    %575 = vmatpush1.msra.mxu0 0.0
    %576 = vmatprep.subr.mxu0 0.0
    %577 = vmatpush1.msra.mxu0 0.0
    %578 = vmatprep.subr.mxu0 0.0
    %579 = vmatpush1.msra.mxu0 0.0
    %580 = vmatprep.subr.mxu0 0.0
    %581 = vmatpush1.msra.mxu0 0.0
    %582 = vmatprep.subr.mxu0 0.0
    %583 = vmatpush1.msra.mxu0 0.0
    %584 = vmatprep.subr.mxu0 0.0
    %585 = vmatpush1.msra.mxu0 0.0
    %586 = vmatprep.subr.mxu0 0.0
    %587 = vmatpush1.msra.mxu0 0.0
    %588 = vmatprep.subr.mxu0 0.0
    %589 = vmatpush1.msra.mxu0 0.0
    %590 = vmatprep.subr.mxu0 0.0
    %591 = vmatpush1.msra.mxu0 0.0
    %592 = vmatprep.subr.mxu0 0.0
    %593 = vmatpush1.msra.mxu0 0.0
    %594 = vmatprep.subr.mxu0 0.0
    %595 = vmatpush1.msra.mxu0 0.0
    %596 = vmatprep.subr.mxu0 0.0
    %597 = vmatpush1.msra.mxu0 0.0
    %598 = vmatprep.subr.mxu0 0.0
    %599 = vmatpush1.msra.mxu0 0.0
    %600 = vmatprep.subr.mxu0 0.0
    %601 = vmatpush1.msra.mxu0 0.0
    %602 = vmatprep.subr.mxu0 0.0
    %603 = vmatpush1.msra.mxu0 0.0
    %604 = vmatprep.mubr.f32.mxu0 0.0
    %605 = vmatmul.mubr.f32.gmra.mrb[0].mxu0 %v523
    %v606 = vpop.f32.mrb[0].mxu0
    %v607 = vadd.f32 0.0, %v606
    %v608 = vpop.f32.mrb[0].mxu0
    %609 = vdwg.mxu0
    %v610 = vadd.f32 %v522, %v607
    %v611 = vtanh.pop %v610
    %612 = vst [vmem:[#allocation3] sm:$0xff] %v611
    %613 = vst [vmem:[%s521] sm:$0xff] %v611
    %s614 = scalar_lea.vmem [#allocation2], 32
    %v615 = vld [vmem:[%s614] sm:$0xff]
    %v616 = vld [vmem:[#allocation3] sm:$0xff]
    %v617 = vld [vmem:[#allocation10] sm:$0xff]
    %v618 = vld [vmem:[#allocation10 + $0x8] sm:$0xff]
    %v619 = vld [vmem:[#allocation10 + $0x10] sm:$0xff]
    %v620 = vld [vmem:[#allocation10 + $0x18] sm:$0xff]
    %v621 = vld [vmem:[#allocation10 + $0x20] sm:$0xff]
    %v622 = vld [vmem:[#allocation10 + $0x28] sm:$0xff]
    %v623 = vld [vmem:[#allocation10 + $0x30] sm:$0xff]
    %v624 = vld [vmem:[#allocation10 + $0x38] sm:$0xff]
    %v625 = vld [vmem:[#allocation10 + $0x40] sm:$0xff]
    %v626 = vld [vmem:[#allocation10 + $0x48] sm:$0xff]
    %v627 = vld [vmem:[#allocation10 + $0x50] sm:$0xff]
    %v628 = vld [vmem:[#allocation10 + $0x58] sm:$0xff]
    %v629 = vld [vmem:[#allocation10 + $0x60] sm:$0xff]
    %v630 = vld [vmem:[#allocation10 + $0x68] sm:$0xff]
    %v631 = vld [vmem:[#allocation10 + $0x70] sm:$0xff]
    %v632 = vld [vmem:[#allocation10 + $0x78] sm:$0xff]
    %633 = vmatprep.subr.mxu0 0.0
    %634 = vmatpush1.msra.mxu0 %v617
    %635 = vmatprep.subr.mxu0 0.0
    %636 = vmatpush1.msra.mxu0 %v618
    %637 = vmatprep.subr.mxu0 0.0
    %638 = vmatpush1.msra.mxu0 %v619
    %639 = vmatprep.subr.mxu0 0.0
    %640 = vmatpush1.msra.mxu0 %v620
    %641 = vmatprep.subr.mxu0 0.0
    %642 = vmatpush1.msra.mxu0 %v621
    %643 = vmatprep.subr.mxu0 0.0
    %644 = vmatpush1.msra.mxu0 %v622
    %645 = vmatprep.subr.mxu0 0.0
    %646 = vmatpush1.msra.mxu0 %v623
    %647 = vmatprep.subr.mxu0 0.0
    %648 = vmatpush1.msra.mxu0 %v624
    %649 = vmatprep.subr.mxu0 0.0
    %650 = vmatpush1.msra.mxu0 %v625
    %651 = vmatprep.subr.mxu0 0.0
    %652 = vmatpush1.msra.mxu0 %v626
    %653 = vmatprep.subr.mxu0 0.0
    %654 = vmatpush1.msra.mxu0 %v627
    %655 = vmatprep.subr.mxu0 0.0
    %656 = vmatpush1.msra.mxu0 %v628
    %657 = vmatprep.subr.mxu0 0.0
    %658 = vmatpush1.msra.mxu0 %v629
    %659 = vmatprep.subr.mxu0 0.0
    %660 = vmatpush1.msra.mxu0 %v630
    %661 = vmatprep.subr.mxu0 0.0
    %662 = vmatpush1.msra.mxu0 %v631
    %663 = vmatprep.subr.mxu0 0.0
    %664 = vmatpush1.msra.mxu0 %v632
    %665 = vmatprep.subr.mxu0 0.0
    %666 = vmatpush1.msra.mxu0 0.0
    %667 = vmatprep.subr.mxu0 0.0
    %668 = vmatpush1.msra.mxu0 0.0
    %669 = vmatprep.subr.mxu0 0.0
    %670 = vmatpush1.msra.mxu0 0.0
    %671 = vmatprep.subr.mxu0 0.0
    %672 = vmatpush1.msra.mxu0 0.0
    %673 = vmatprep.subr.mxu0 0.0
    %674 = vmatpush1.msra.mxu0 0.0
    %675 = vmatprep.subr.mxu0 0.0
    %676 = vmatpush1.msra.mxu0 0.0
    %677 = vmatprep.subr.mxu0 0.0
    %678 = vmatpush1.msra.mxu0 0.0
    %679 = vmatprep.subr.mxu0 0.0
    %680 = vmatpush1.msra.mxu0 0.0
    %681 = vmatprep.subr.mxu0 0.0
    %682 = vmatpush1.msra.mxu0 0.0
    %683 = vmatprep.subr.mxu0 0.0
    %684 = vmatpush1.msra.mxu0 0.0
    %685 = vmatprep.subr.mxu0 0.0
    %686 = vmatpush1.msra.mxu0 0.0
    %687 = vmatprep.subr.mxu0 0.0
    %688 = vmatpush1.msra.mxu0 0.0
    %689 = vmatprep.subr.mxu0 0.0
    %690 = vmatpush1.msra.mxu0 0.0
    %691 = vmatprep.subr.mxu0 0.0
    %692 = vmatpush1.msra.mxu0 0.0
    %693 = vmatprep.subr.mxu0 0.0
    %694 = vmatpush1.msra.mxu0 0.0
    %695 = vmatprep.subr.mxu0 0.0
    %696 = vmatpush1.msra.mxu0 0.0
    %697 = vmatprep.mubr.f32.mxu0 0.0
    %698 = vmatmul.mubr.f32.gmra.mrb[0].mxu0 %v616
    %v699 = vpop.f32.mrb[0].mxu0
    %v700 = vadd.f32 0.0, %v699
    %v701 = vpop.f32.mrb[0].mxu0
    %702 = vdwg.mxu0
    %v703 = vadd.f32 %v615, %v700
    %v704 = vtanh.pop %v703
    %705 = vst [vmem:[#allocation3] sm:$0xff] %v704
    %706 = vst [vmem:[%s614] sm:$0xff] %v704
    %s707 = scalar_lea.vmem [#allocation2], 40
    %v708 = vld [vmem:[%s707] sm:$0xff]
    %v709 = vld [vmem:[#allocation3] sm:$0xff]
    %v710 = vld [vmem:[#allocation10] sm:$0xff]
    %v711 = vld [vmem:[#allocation10 + $0x8] sm:$0xff]
    %v712 = vld [vmem:[#allocation10 + $0x10] sm:$0xff]
    %v713 = vld [vmem:[#allocation10 + $0x18] sm:$0xff]
    %v714 = vld [vmem:[#allocation10 + $0x20] sm:$0xff]
    %v715 = vld [vmem:[#allocation10 + $0x28] sm:$0xff]
    %v716 = vld [vmem:[#allocation10 + $0x30] sm:$0xff]
    %v717 = vld [vmem:[#allocation10 + $0x38] sm:$0xff]
    %v718 = vld [vmem:[#allocation10 + $0x40] sm:$0xff]
    %v719 = vld [vmem:[#allocation10 + $0x48] sm:$0xff]
    %v720 = vld [vmem:[#allocation10 + $0x50] sm:$0xff]
    %v721 = vld [vmem:[#allocation10 + $0x58] sm:$0xff]
    %v722 = vld [vmem:[#allocation10 + $0x60] sm:$0xff]
    %v723 = vld [vmem:[#allocation10 + $0x68] sm:$0xff]
    %v724 = vld [vmem:[#allocation10 + $0x70] sm:$0xff]
    %v725 = vld [vmem:[#allocation10 + $0x78] sm:$0xff]
    %726 = vmatprep.subr.mxu0 0.0
    %727 = vmatpush1.msra.mxu0 %v710
    %728 = vmatprep.subr.mxu0 0.0
    %729 = vmatpush1.msra.mxu0 %v711
    %730 = vmatprep.subr.mxu0 0.0
    %731 = vmatpush1.msra.mxu0 %v712
    %732 = vmatprep.subr.mxu0 0.0
    %733 = vmatpush1.msra.mxu0 %v713
    %734 = vmatprep.subr.mxu0 0.0
    %735 = vmatpush1.msra.mxu0 %v714
    %736 = vmatprep.subr.mxu0 0.0
    %737 = vmatpush1.msra.mxu0 %v715
    %738 = vmatprep.subr.mxu0 0.0
    %739 = vmatpush1.msra.mxu0 %v716
    %740 = vmatprep.subr.mxu0 0.0
    %741 = vmatpush1.msra.mxu0 %v717
    %742 = vmatprep.subr.mxu0 0.0
    %743 = vmatpush1.msra.mxu0 %v718
    %744 = vmatprep.subr.mxu0 0.0
    %745 = vmatpush1.msra.mxu0 %v719
    %746 = vmatprep.subr.mxu0 0.0
    %747 = vmatpush1.msra.mxu0 %v720
    %748 = vmatprep.subr.mxu0 0.0
    %749 = vmatpush1.msra.mxu0 %v721
    %750 = vmatprep.subr.mxu0 0.0
    %751 = vmatpush1.msra.mxu0 %v722
    %752 = vmatprep.subr.mxu0 0.0
    %753 = vmatpush1.msra.mxu0 %v723
    %754 = vmatprep.subr.mxu0 0.0
    %755 = vmatpush1.msra.mxu0 %v724
    %756 = vmatprep.subr.mxu0 0.0
    %757 = vmatpush1.msra.mxu0 %v725
    %758 = vmatprep.subr.mxu0 0.0
    %759 = vmatpush1.msra.mxu0 0.0
    %760 = vmatprep.subr.mxu0 0.0
    %761 = vmatpush1.msra.mxu0 0.0
    %762 = vmatprep.subr.mxu0 0.0
    %763 = vmatpush1.msra.mxu0 0.0
    %764 = vmatprep.subr.mxu0 0.0
    %765 = vmatpush1.msra.mxu0 0.0
    %766 = vmatprep.subr.mxu0 0.0
    %767 = vmatpush1.msra.mxu0 0.0
    %768 = vmatprep.subr.mxu0 0.0
    %769 = vmatpush1.msra.mxu0 0.0
    %770 = vmatprep.subr.mxu0 0.0
    %771 = vmatpush1.msra.mxu0 0.0
    %772 = vmatprep.subr.mxu0 0.0
    %773 = vmatpush1.msra.mxu0 0.0
    %774 = vmatprep.subr.mxu0 0.0
    %775 = vmatpush1.msra.mxu0 0.0
    %776 = vmatprep.subr.mxu0 0.0
    %777 = vmatpush1.msra.mxu0 0.0
    %778 = vmatprep.subr.mxu0 0.0
    %779 = vmatpush1.msra.mxu0 0.0
    %780 = vmatprep.subr.mxu0 0.0
    %781 = vmatpush1.msra.mxu0 0.0
    %782 = vmatprep.subr.mxu0 0.0
    %783 = vmatpush1.msra.mxu0 0.0
    %784 = vmatprep.subr.mxu0 0.0
    %785 = vmatpush1.msra.mxu0 0.0
    %786 = vmatprep.subr.mxu0 0.0
    %787 = vmatpush1.msra.mxu0 0.0
    %788 = vmatprep.subr.mxu0 0.0
    %789 = vmatpush1.msra.mxu0 0.0
    %790 = vmatprep.mubr.f32.mxu0 0.0
    %791 = vmatmul.mubr.f32.gmra.mrb[0].mxu0 %v709
    %v792 = vpop.f32.mrb[0].mxu0
    %v793 = vadd.f32 0.0, %v792
    %v794 = vpop.f32.mrb[0].mxu0
    %795 = vdwg.mxu0
    %v796 = vadd.f32 %v708, %v793
    %v797 = vtanh.pop %v796
    %798 = vst [vmem:[#allocation3] sm:$0xff] %v797
    %799 = vst [vmem:[%s707] sm:$0xff] %v797
    %s800 = scalar_lea.vmem [#allocation2], 48
    %v801 = vld [vmem:[%s800] sm:$0xff]
    %v802 = vld [vmem:[#allocation3] sm:$0xff]
    %v803 = vld [vmem:[#allocation10] sm:$0xff]
    %v804 = vld [vmem:[#allocation10 + $0x8] sm:$0xff]
    %v805 = vld [vmem:[#allocation10 + $0x10] sm:$0xff]
    %v806 = vld [vmem:[#allocation10 + $0x18] sm:$0xff]
    %v807 = vld [vmem:[#allocation10 + $0x20] sm:$0xff]
    %v808 = vld [vmem:[#allocation10 + $0x28] sm:$0xff]
    %v809 = vld [vmem:[#allocation10 + $0x30] sm:$0xff]
    %v810 = vld [vmem:[#allocation10 + $0x38] sm:$0xff]
    %v811 = vld [vmem:[#allocation10 + $0x40] sm:$0xff]
    %v812 = vld [vmem:[#allocation10 + $0x48] sm:$0xff]
    %v813 = vld [vmem:[#allocation10 + $0x50] sm:$0xff]
    %v814 = vld [vmem:[#allocation10 + $0x58] sm:$0xff]
    %v815 = vld [vmem:[#allocation10 + $0x60] sm:$0xff]
    %v816 = vld [vmem:[#allocation10 + $0x68] sm:$0xff]
    %v817 = vld [vmem:[#allocation10 + $0x70] sm:$0xff]
    %v818 = vld [vmem:[#allocation10 + $0x78] sm:$0xff]
    %819 = vmatprep.subr.mxu0 0.0
    %820 = vmatpush1.msra.mxu0 %v803
    %821 = vmatprep.subr.mxu0 0.0
    %822 = vmatpush1.msra.mxu0 %v804
    %823 = vmatprep.subr.mxu0 0.0
    %824 = vmatpush1.msra.mxu0 %v805
    %825 = vmatprep.subr.mxu0 0.0
    %826 = vmatpush1.msra.mxu0 %v806
    %827 = vmatprep.subr.mxu0 0.0
    %828 = vmatpush1.msra.mxu0 %v807
    %829 = vmatprep.subr.mxu0 0.0
    %830 = vmatpush1.msra.mxu0 %v808
    %831 = vmatprep.subr.mxu0 0.0
    %832 = vmatpush1.msra.mxu0 %v809
    %833 = vmatprep.subr.mxu0 0.0
    %834 = vmatpush1.msra.mxu0 %v810
    %835 = vmatprep.subr.mxu0 0.0
    %836 = vmatpush1.msra.mxu0 %v811
    %837 = vmatprep.subr.mxu0 0.0
    %838 = vmatpush1.msra.mxu0 %v812
    %839 = vmatprep.subr.mxu0 0.0
    %840 = vmatpush1.msra.mxu0 %v813
    %841 = vmatprep.subr.mxu0 0.0
    %842 = vmatpush1.msra.mxu0 %v814
    %843 = vmatprep.subr.mxu0 0.0
    %844 = vmatpush1.msra.mxu0 %v815
    %845 = vmatprep.subr.mxu0 0.0
    %846 = vmatpush1.msra.mxu0 %v816
    %847 = vmatprep.subr.mxu0 0.0
    %848 = vmatpush1.msra.mxu0 %v817
    %849 = vmatprep.subr.mxu0 0.0
    %850 = vmatpush1.msra.mxu0 %v818
    %851 = vmatprep.subr.mxu0 0.0
    %852 = vmatpush1.msra.mxu0 0.0
    %853 = vmatprep.subr.mxu0 0.0
    %854 = vmatpush1.msra.mxu0 0.0
    %855 = vmatprep.subr.mxu0 0.0
    %856 = vmatpush1.msra.mxu0 0.0
    %857 = vmatprep.subr.mxu0 0.0
    %858 = vmatpush1.msra.mxu0 0.0
    %859 = vmatprep.subr.mxu0 0.0
    %860 = vmatpush1.msra.mxu0 0.0
    %861 = vmatprep.subr.mxu0 0.0
    %862 = vmatpush1.msra.mxu0 0.0
    %863 = vmatprep.subr.mxu0 0.0
    %864 = vmatpush1.msra.mxu0 0.0
    %865 = vmatprep.subr.mxu0 0.0
    %866 = vmatpush1.msra.mxu0 0.0
    %867 = vmatprep.subr.mxu0 0.0
    %868 = vmatpush1.msra.mxu0 0.0
    %869 = vmatprep.subr.mxu0 0.0
    %870 = vmatpush1.msra.mxu0 0.0
    %871 = vmatprep.subr.mxu0 0.0
    %872 = vmatpush1.msra.mxu0 0.0
    %873 = vmatprep.subr.mxu0 0.0
    %874 = vmatpush1.msra.mxu0 0.0
    %875 = vmatprep.subr.mxu0 0.0
    %876 = vmatpush1.msra.mxu0 0.0
    %877 = vmatprep.subr.mxu0 0.0
    %878 = vmatpush1.msra.mxu0 0.0
    %879 = vmatprep.subr.mxu0 0.0
    %880 = vmatpush1.msra.mxu0 0.0
    %881 = vmatprep.subr.mxu0 0.0
    %882 = vmatpush1.msra.mxu0 0.0
    %883 = vmatprep.mubr.f32.mxu0 0.0
    %884 = vmatmul.mubr.f32.gmra.mrb[0].mxu0 %v802
    %v885 = vpop.f32.mrb[0].mxu0
    %v886 = vadd.f32 0.0, %v885
    %v887 = vpop.f32.mrb[0].mxu0
    %888 = vdwg.mxu0
    %v889 = vadd.f32 %v801, %v886
    %v890 = vtanh.pop %v889
    %891 = vst [vmem:[#allocation3] sm:$0xff] %v890
    %892 = vst [vmem:[%s800] sm:$0xff] %v890
    %s893 = scalar_lea.vmem [#allocation2], 56
    %v894 = vld [vmem:[%s893] sm:$0xff]
    %v895 = vld [vmem:[#allocation3] sm:$0xff]
    %v896 = vld [vmem:[#allocation10] sm:$0xff]
    %v897 = vld [vmem:[#allocation10 + $0x8] sm:$0xff]
    %v898 = vld [vmem:[#allocation10 + $0x10] sm:$0xff]
    %v899 = vld [vmem:[#allocation10 + $0x18] sm:$0xff]
    %v900 = vld [vmem:[#allocation10 + $0x20] sm:$0xff]
    %v901 = vld [vmem:[#allocation10 + $0x28] sm:$0xff]
    %v902 = vld [vmem:[#allocation10 + $0x30] sm:$0xff]
    %v903 = vld [vmem:[#allocation10 + $0x38] sm:$0xff]
    %v904 = vld [vmem:[#allocation10 + $0x40] sm:$0xff]
    %v905 = vld [vmem:[#allocation10 + $0x48] sm:$0xff]
    %v906 = vld [vmem:[#allocation10 + $0x50] sm:$0xff]
    %v907 = vld [vmem:[#allocation10 + $0x58] sm:$0xff]
    %v908 = vld [vmem:[#allocation10 + $0x60] sm:$0xff]
    %v909 = vld [vmem:[#allocation10 + $0x68] sm:$0xff]
    %v910 = vld [vmem:[#allocation10 + $0x70] sm:$0xff]
    %v911 = vld [vmem:[#allocation10 + $0x78] sm:$0xff]
    %912 = vmatprep.subr.mxu0 0.0
    %913 = vmatpush1.msra.mxu0 %v896
    %914 = vmatprep.subr.mxu0 0.0
    %915 = vmatpush1.msra.mxu0 %v897
    %916 = vmatprep.subr.mxu0 0.0
    %917 = vmatpush1.msra.mxu0 %v898
    %918 = vmatprep.subr.mxu0 0.0
    %919 = vmatpush1.msra.mxu0 %v899
    %920 = vmatprep.subr.mxu0 0.0
    %921 = vmatpush1.msra.mxu0 %v900
    %922 = vmatprep.subr.mxu0 0.0
    %923 = vmatpush1.msra.mxu0 %v901
    %924 = vmatprep.subr.mxu0 0.0
    %925 = vmatpush1.msra.mxu0 %v902
    %926 = vmatprep.subr.mxu0 0.0
    %927 = vmatpush1.msra.mxu0 %v903
    %928 = vmatprep.subr.mxu0 0.0
    %929 = vmatpush1.msra.mxu0 %v904
    %930 = vmatprep.subr.mxu0 0.0
    %931 = vmatpush1.msra.mxu0 %v905
    %932 = vmatprep.subr.mxu0 0.0
    %933 = vmatpush1.msra.mxu0 %v906
    %934 = vmatprep.subr.mxu0 0.0
    %935 = vmatpush1.msra.mxu0 %v907
    %936 = vmatprep.subr.mxu0 0.0
    %937 = vmatpush1.msra.mxu0 %v908
    %938 = vmatprep.subr.mxu0 0.0
    %939 = vmatpush1.msra.mxu0 %v909
    %940 = vmatprep.subr.mxu0 0.0
    %941 = vmatpush1.msra.mxu0 %v910
    %942 = vmatprep.subr.mxu0 0.0
    %943 = vmatpush1.msra.mxu0 %v911
    %944 = vmatprep.subr.mxu0 0.0
    %945 = vmatpush1.msra.mxu0 0.0
    %946 = vmatprep.subr.mxu0 0.0
    %947 = vmatpush1.msra.mxu0 0.0
    %948 = vmatprep.subr.mxu0 0.0
    %949 = vmatpush1.msra.mxu0 0.0
    %950 = vmatprep.subr.mxu0 0.0
    %951 = vmatpush1.msra.mxu0 0.0
    %952 = vmatprep.subr.mxu0 0.0
    %953 = vmatpush1.msra.mxu0 0.0
    %954 = vmatprep.subr.mxu0 0.0
    %955 = vmatpush1.msra.mxu0 0.0
    %956 = vmatprep.subr.mxu0 0.0
    %957 = vmatpush1.msra.mxu0 0.0
    %958 = vmatprep.subr.mxu0 0.0
    %959 = vmatpush1.msra.mxu0 0.0
    %960 = vmatprep.subr.mxu0 0.0
    %961 = vmatpush1.msra.mxu0 0.0
    %962 = vmatprep.subr.mxu0 0.0
    %963 = vmatpush1.msra.mxu0 0.0
    %964 = vmatprep.subr.mxu0 0.0
    %965 = vmatpush1.msra.mxu0 0.0
    %966 = vmatprep.subr.mxu0 0.0
    %967 = vmatpush1.msra.mxu0 0.0
    %968 = vmatprep.subr.mxu0 0.0
    %969 = vmatpush1.msra.mxu0 0.0
    %970 = vmatprep.subr.mxu0 0.0
    %971 = vmatpush1.msra.mxu0 0.0
    %972 = vmatprep.subr.mxu0 0.0
    %973 = vmatpush1.msra.mxu0 0.0
    %974 = vmatprep.subr.mxu0 0.0
    %975 = vmatpush1.msra.mxu0 0.0
    %976 = vmatprep.mubr.f32.mxu0 0.0
    %977 = vmatmul.mubr.f32.gmra.mrb[0].mxu0 %v895
    %v978 = vpop.f32.mrb[0].mxu0
    %v979 = vadd.f32 0.0, %v978
    %v980 = vpop.f32.mrb[0].mxu0
    %981 = vdwg.mxu0
    %v982 = vadd.f32 %v894, %v979
    %v983 = vtanh.pop %v982
    %984 = vst [vmem:[#allocation3] sm:$0xff] %v983
    %985 = vst [vmem:[%s893] sm:$0xff] %v983
    %v986 = vld [vmem:[#allocation2] sm:$0xff]
    %v987 = vld [vmem:[#allocation2 + $0x8] sm:$0xff]
    %v988 = vld [vmem:[#allocation2 + $0x10] sm:$0xff]
    %v989 = vld [vmem:[#allocation2 + $0x18] sm:$0xff]
    %v990 = vld [vmem:[#allocation2 + $0x20] sm:$0xff]
    %v991 = vld [vmem:[#allocation2 + $0x28] sm:$0xff]
    %v992 = vld [vmem:[#allocation2 + $0x30] sm:$0xff]
    %v993 = vld [vmem:[#allocation2 + $0x38] sm:$0xff]
    %v994 = vld [vmem:[#allocation13] sm:$0x1]
    %v996 = vlaneseq
    %v997 = vshrl.u32 %v996, 7
    %v998 = vsub.s32 0, %v997
    %v999 = vrot.slane %v994, %v998
    %v1001 = vmul.f32 %v986, %v999
    %v1002 = vmul.f32 %v987, %v999
    %v1003 = vmul.f32 %v988, %v999
    %v1004 = vmul.f32 %v989, %v999
    %v1005 = vmul.f32 %v990, %v999
    %v1006 = vmul.f32 %v991, %v999
    %v1007 = vmul.f32 %v992, %v999
    %v1008 = vmul.f32 %v993, %v999
    %1009 = vadd.xlane.f32.xlu0 %v1001
    %v1010 = vpop.xlane.xlu0 %1009
    %1011 = vadd.xlane.f32.xlu0 %v1002
    %v1012 = vpop.xlane.xlu0 %1011
    %1013 = vadd.xlane.f32.xlu0 %v1003
    %v1014 = vpop.xlane.xlu0 %1013
    %1015 = vadd.xlane.f32.xlu0 %v1004
    %v1016 = vpop.xlane.xlu0 %1015
    %1017 = vadd.xlane.f32.xlu0 %v1005
    %v1018 = vpop.xlane.xlu0 %1017
    %1019 = vadd.xlane.f32.xlu0 %v1006
    %v1020 = vpop.xlane.xlu0 %1019
    %1021 = vadd.xlane.f32.xlu0 %v1007
    %v1022 = vpop.xlane.xlu0 %1021
    %1023 = vadd.xlane.f32.xlu0 %v1008
    %v1024 = vpop.xlane.xlu0 %1023
    %v1025 = vld [vmem:[#allocation4] sm:$0x1]
    %v1027 = vlaneseq
    %v1028 = vshrl.u32 %v1027, 7
    %v1029 = vsub.s32 0, %v1028
    %v1030 = vrot.slane %v1025, %v1029
    %1031 = vset.pattern.permute.xlu0 0
    %1032 = vperm.xlu0 %1031, %v1030
    %v1033 = vpop.permute.xlu0 %1032
    %v1035 = vadd.f32 %v1010, %v1033
    %v1036 = vadd.f32 %v1012, %v1033
    %v1037 = vadd.f32 %v1014, %v1033
    %v1038 = vadd.f32 %v1016, %v1033
    %v1039 = vadd.f32 %v1018, %v1033
    %v1040 = vadd.f32 %v1020, %v1033
    %v1041 = vadd.f32 %v1022, %v1033
    %v1042 = vadd.f32 %v1024, %v1033
    %v1051 = vlaneseq
    %v1052 = vand.u32 %v1051, 127
    %v1053 = vlaneseq
    %v1054 = vshrl.u32 %v1053, 7
    %v1055 = vsub.s32 %v1052, %v1054
    %v1056 = vrot.slane %v1035, %v1055
    %v1057 = vlaneseq
    %v1058 = vshrl.u32 %v1057, 7
    %v1059 = vsub.s32 %v1052, %v1058
    %v1060 = vrot.slane %v1036, %v1059
    %v1061 = vlaneseq
    %v1062 = vshrl.u32 %v1061, 7
    %v1063 = vsub.s32 %v1052, %v1062
    %v1064 = vrot.slane %v1037, %v1063
    %v1065 = vlaneseq
    %v1066 = vshrl.u32 %v1065, 7
    %v1067 = vsub.s32 %v1052, %v1066
    %v1068 = vrot.slane %v1038, %v1067
    %v1069 = vlaneseq
    %v1070 = vshrl.u32 %v1069, 7
    %v1071 = vsub.s32 %v1052, %v1070
    %v1072 = vrot.slane %v1039, %v1071
    %v1073 = vlaneseq
    %v1074 = vshrl.u32 %v1073, 7
    %v1075 = vsub.s32 %v1052, %v1074
    %v1076 = vrot.slane %v1040, %v1075
    %v1077 = vlaneseq
    %v1078 = vshrl.u32 %v1077, 7
    %v1079 = vsub.s32 %v1052, %v1078
    %v1080 = vrot.slane %v1041, %v1079
    %v1081 = vlaneseq
    %v1082 = vshrl.u32 %v1081, 7
    %v1083 = vsub.s32 %v1052, %v1082
    %v1084 = vrot.slane %v1042, %v1083
    %vm1085 = vcmask 1041409
    %v1086 = vsel %vm1085, %v1060, %v1056
    %vm1087 = vcmask 1042434
    %v1088 = vsel %vm1087, %v1064, %v1086
    %vm1089 = vcmask 1043459
    %v1090 = vsel %vm1089, %v1068, %v1088
    %vm1091 = vcmask 1044484
    %v1092 = vsel %vm1091, %v1072, %v1090
    %vm1093 = vcmask 1045509
    %v1094 = vsel %vm1093, %v1076, %v1092
    %vm1095 = vcmask 1046534
    %v1096 = vsel %vm1095, %v1080, %v1094
    %vm1097 = vcmask 1047559
    %v1098 = vsel %vm1097, %v1084, %v1096
    %vm1100 = vcmask 64512
    %1101 = vst.msk [vmem:[#allocation14] sm:$0xff] %vm1100, %v1098
    // Predicated region
    $region46: #{tpu_custom_call.1} parent=1 // pred_check
      _
    $region47: #{tpu_custom_call.1} parent=1 // pred_check_branch
      %1103 = sbr.rel (0) target = $region49
    $region48: #{tpu_custom_call.1} parent=1 // pred_region
      %s1105 = ssub.s32 128, 128
      %1106 = vsyncadd [#allocation7], %s1105
      %s1108 = sshll.u32 [#allocation14], 4
      %s1109 = int_to_ptr.vmem [resolvable:$true] %s1108
      %1111 = dma.vmem_to_hbm [thread:$0]  %s1109, 128, %s6, [#allocation7]
    $region49: #{tpu_custom_call.1} parent=1 // pred_fallthru
      _
    // Predicated region
    $region50: #{tpu_custom_call.1} parent=1 // pred_check
      _
    $region51: #{tpu_custom_call.1} parent=1 // pred_check_branch
      %1113 = sbr.rel (0) target = $region53
    $region52: #{tpu_custom_call.1} parent=1 // pred_region
      %1114 = dma.done [#allocation7], 128
    $region53: #{tpu_custom_call.1} parent=1 // pred_fallthru
      _
    %1115 = vsyncpa [#allocation6], 1
    %1116 = vsyncpa [#allocation9], 1
    %1117 = vsyncpa [#allocation12], 1
    %1118 = vsyncpa [#allocation7], 1

</llo_original>
